<compile_context>
chip_gen: v7x
topology: tpu7x:2x2x1
jax: 0.10.0
libtpu: 0.0.40
codegen_flags: <defaults>
</compile_context>

<pallas_src>
import functools
import math
import numpy as np
import jax
import jax.numpy as jnp
from jax.experimental import pallas as pl
from jax.experimental.pallas import tpu as pltpu


def _round_up(x, m):
    return ((x + m - 1) // m) * m


def _nudft_kernel(wri_ref, trj_ref, tr_ref, ti_ref,
                  kr_ref, ki_ref,
                  cosb_ref, sinb_ref, accc_ref, accs_ref,
                  *, H, W, Wp, C_pad, L, H_tile):
    # grid = (k_tiles [parallel], row_tiles [arbitrary, reduction over pixels])
    p = pl.program_id(1)

    @pl.when(p == 0)
    def _():
        accc_ref[...] = jnp.zeros_like(accc_ref)
        accs_ref[...] = jnp.zeros_like(accs_ref)
        # Column phase term B[c, k] = 2*pi * (c - W//2)/W * trj1[k].
        # Invariant across all pixel-row (p) steps of this k tile -> hoisted here.
        col = jax.lax.broadcasted_iota(jnp.int32, (Wp, 1), 0)
        gc = (col.astype(jnp.float32) - jnp.float32(W // 2)) * jnp.float32(2.0 * np.pi / W)
        phase_b = gc * trj_ref[1:2, :]                       # (Wp, kt)
        cosb_ref[...] = jnp.cos(phase_b)
        sinb_ref[...] = jnp.sin(phase_b)

    # Row phase term A[r, k] = 2*pi * (r - H//2)/H * trj0[k] for this row tile.
    row = p * H_tile + jax.lax.broadcasted_iota(jnp.int32, (H_tile, 1), 0)
    gr = (row.astype(jnp.float32) - jnp.float32(H // 2)) * jnp.float32(2.0 * np.pi / H)
    phase_a = gr * trj_ref[0:1, :]                           # (H_tile, kt)
    cosa = jnp.cos(phase_a)[:, None, :]                      # (H_tile, 1, kt)  -- EUP
    sina = jnp.sin(phase_a)[:, None, :]

    cosb = cosb_ref[...][None, :, :]                         # (1, Wp, kt)
    sinb = sinb_ref[...][None, :, :]
    kt = cosb.shape[-1]

    # cos(A+B) / sin(A+B) reconstructed on the VPU (broadcast mul/add), row-major
    # flat pixel order (r*Wp + c) matching the wri contraction axis.
    cos_m = (cosa * cosb - sina * sinb).reshape(H_tile * Wp, kt)
    sin_m = (sina * cosb + cosa * sinb).reshape(H_tile * Wp, kt)

    # wri rows: [0, L*C_pad) = Re(w), [L*C_pad, 2*L*C_pad) = Im(w);
    # w[l*C_pad + c] = img[c] * spatial[l] for this pixel tile.
    wri = wri_ref[...]                                       # (2*L*C_pad, H_tile*Wp)
    accc_ref[...] += jnp.dot(wri, cos_m, preferred_element_type=jnp.float32)
    accs_ref[...] += jnp.dot(wri, sin_m, preferred_element_type=jnp.float32)

    @pl.when(p == pl.num_programs(1) - 1)
    def _():
        LC = L * C_pad
        acc_c = accc_ref[...]                                # (2*LC, kt)
        acc_s = accs_ref[...]
        # exact type-2 NUDFT: w * e^{-i phase} => Re = wr@cos + wi@sin, Im = wi@cos - wr@sin
        f_r = (acc_c[:LC] + acc_s[LC:]).reshape(L, C_pad, acc_c.shape[-1])
        f_i = (acc_c[LC:] - acc_s[:LC]).reshape(L, C_pad, acc_c.shape[-1])
        tr = tr_ref[...][:, None, :]                         # (L, 1, kt); 1/sqrt(npix) pre-folded
        ti = ti_ref[...][:, None, :]
        kr_ref[...] = jnp.sum(f_r * tr - f_i * ti, axis=0)   # lane-dense (C_pad, kt)
        ki_ref[...] = jnp.sum(f_r * ti + f_i * tr, axis=0)


def multi_chan_linop_forward(img, trj, spatial_funcs, temporal_funcs, im_size,
                             npix_tile=1024, k_tile=1024):
    """img: (C, H, W) complex; trj: (K, d) float; spatial_funcs: (L, H, W) complex;
    temporal_funcs: (L, K) complex. Returns ksp: (C, K) complex64."""
    C = img.shape[0]
    H, W = im_size
    K = trj.shape[0]
    L = spatial_funcs.shape[0]
    d = trj.shape[-1]
    assert d == 2, "only 2D trajectories supported"

    # Sublane-friendly padding of channels and image columns.
    C_pad = _round_up(C, 8)
    W_pad = _round_up(W, 8)

    # Row-tile size: H_tile * W_pad (the flat-pixel block lane dim) must be a
    # multiple of 128; aim for ~npix_tile flat pixels per tile.
    req = 128 // math.gcd(W_pad, 128)
    H_tile = max(req, (max(npix_tile // W_pad, 1) // req) * req)
    H_tile = min(H_tile, _round_up(H, req))
    H_pad = _round_up(H, H_tile)
    npt = H_tile * W_pad

    k_tile = min(k_tile, _round_up(K, 128))
    k_pad = _round_up(K, k_tile)

    # Fold channels & segments into one matmul LHS: row l*C_pad + c = img[c]*spatial[l];
    # stack real over imag along rows so each trig matrix is streamed through the MXU once.
    w = spatial_funcs[:, None, :, :] * img[None, :, :, :]          # (L, C, H, W)
    w = jnp.pad(w, ((0, 0), (0, C_pad - C), (0, H_pad - H), (0, W_pad - W)))
    w = w.reshape(L * C_pad, H_pad * W_pad)
    wri = jnp.concatenate([jnp.real(w), jnp.imag(w)], axis=0).astype(jnp.float32)

    trj_t = jnp.pad(jnp.asarray(trj, jnp.float32).T, ((0, 0), (0, k_pad - K)))   # (d, k_pad)
    scale = np.float32(1.0 / np.sqrt(float(H * W)))
    tr = jnp.pad(jnp.real(temporal_funcs).astype(jnp.float32) * scale,
                 ((0, 0), (0, k_pad - K)))
    ti = jnp.pad(jnp.imag(temporal_funcs).astype(jnp.float32) * scale,
                 ((0, 0), (0, k_pad - K)))

    grid = (k_pad // k_tile, H_pad // H_tile)

    kernel = functools.partial(_nudft_kernel, H=H, W=W, Wp=W_pad,
                               C_pad=C_pad, L=L, H_tile=H_tile)

    kr, ki = pl.pallas_call(
        kernel,
        out_shape=[jax.ShapeDtypeStruct((C_pad, k_pad), jnp.float32),
                   jax.ShapeDtypeStruct((C_pad, k_pad), jnp.float32)],
        grid=grid,
        in_specs=[
            pl.BlockSpec((2 * L * C_pad, npt), lambda k, p: (0, p)),   # [Re(w); Im(w)]
            pl.BlockSpec((d, k_tile), lambda k, p: (0, k)),            # trj (d, K)
            pl.BlockSpec((L, k_tile), lambda k, p: (0, k)),            # temporal real (scaled)
            pl.BlockSpec((L, k_tile), lambda k, p: (0, k)),            # temporal imag (scaled)
        ],
        out_specs=[
            pl.BlockSpec((C_pad, k_tile), lambda k, p: (0, k)),
            pl.BlockSpec((C_pad, k_tile), lambda k, p: (0, k)),
        ],
        scratch_shapes=[
            pltpu.VMEM((W_pad, k_tile), jnp.float32),                  # cosB (per-k-tile)
            pltpu.VMEM((W_pad, k_tile), jnp.float32),                  # sinB
            pltpu.VMEM((2 * L * C_pad, k_tile), jnp.float32),          # acc of wri @ cos
            pltpu.VMEM((2 * L * C_pad, k_tile), jnp.float32),          # acc of wri @ sin
        ],
        compiler_params=pltpu.CompilerParams(
            dimension_semantics=("parallel", "arbitrary"),
            vmem_limit_bytes=48 * 1024 * 1024),
    )(wri, trj_t, tr, ti)

    return (kr + 1j * ki)[:C, :K].astype(jnp.complex64)


if __name__ == "__main__":
    C, H, W, K, L, d = 2, 16, 16, 256, 2, 2

    key = jax.random.PRNGKey(0)
    ks = jax.random.split(key, 8)
    img = (jax.random.normal(ks[0], (C, H, W)) +
           1j * jax.random.normal(ks[1], (C, H, W))).astype(jnp.complex64)
    trj = jax.random.uniform(ks[2], (K, d), minval=-H / 2, maxval=H / 2).astype(jnp.float32)
    spatial_funcs = (jax.random.normal(ks[3], (L, H, W)) +
                     1j * jax.random.normal(ks[4], (L, H, W))).astype(jnp.complex64)
    temporal_funcs = (jax.random.normal(ks[5], (L, K)) +
                      1j * jax.random.normal(ks[6], (L, K))).astype(jnp.complex64)

    # Small tiles so the test exercises the tiled K axis and the pixel-row reduction (grid 2x2).
    ksp = multi_chan_linop_forward(img, trj, spatial_funcs, temporal_funcs, (H, W),
                                   npix_tile=128, k_tile=128)
    ksp = jax.block_until_ready(ksp)

    # pure-JAX reference (same math) for a correctness sanity check
    rr = (jnp.arange(H, dtype=jnp.float32) - H // 2) / H
    cc = (jnp.arange(W, dtype=jnp.float32) - W // 2) / W
    phase = 2.0 * jnp.pi * (trj[:, 0, None, None] * rr[None, :, None] +
                            trj[:, 1, None, None] * cc[None, None, :])       # (K, H, W)
    E = jnp.exp(-1j * phase)
    F = jnp.einsum('cyx,lyx,kyx->clk', img, spatial_funcs, E)
    ref = jnp.einsum('clk,lk->ck', F, temporal_funcs) / jnp.sqrt(float(H * W))

    rel_err = jnp.linalg.norm(ksp - ref) / jnp.linalg.norm(ref)
    assert float(rel_err) < 2e-3, f"relative error too large: {float(rel_err)}"
    print("KERNEL_OK")
</pallas_src>

<mosaic_0001>
module attributes {stable_mosaic.version = 11 : i64} {
  func.func @_nudft_kernel(%arg0: i32, %arg1: i32, %arg2: memref<32x128xf32, #tpu.memory_space<vmem>>, %arg3: memref<2x128xf32, #tpu.memory_space<vmem>>, %arg4: memref<2x128xf32, #tpu.memory_space<vmem>>, %arg5: memref<2x128xf32, #tpu.memory_space<vmem>>, %arg6: memref<8x128xf32, #tpu.memory_space<vmem>>, %arg7: memref<8x128xf32, #tpu.memory_space<vmem>>, %arg8: memref<16x128xf32, #tpu.memory_space<vmem>>, %arg9: memref<16x128xf32, #tpu.memory_space<vmem>>, %arg10: memref<32x128xf32, #tpu.memory_space<vmem>>, %arg11: memref<32x128xf32, #tpu.memory_space<vmem>>) attributes {dimension_semantics = [#tpu.dimension_semantics<parallel>, #tpu.dimension_semantics<arbitrary>], iteration_bounds = array<i64: 2, 2>, scalar_prefetch = 0 : i64, scratch_operands = 4 : i64, tpu.core_type = #tpu.core_type<tc>, window_params = [{transform_indices = @transform_0, window_bounds = array<i64: 32, 128>}, {transform_indices = @transform_1, window_bounds = array<i64: 2, 128>}, {transform_indices = @transform_2, window_bounds = array<i64: 2, 128>}, {transform_indices = @transform_3, window_bounds = array<i64: 2, 128>}, {transform_indices = @transform_4, window_bounds = array<i64: 8, 128>}, {transform_indices = @transform_5, window_bounds = array<i64: 8, 128>}]} {
    %c0_i32 = arith.constant 0 : i32
    %0 = arith.cmpi eq, %arg1, %c0_i32 : i32
    %1 = arith.extui %0 : i1 to i32
    %c0_i32_0 = arith.constant 0 : i32
    %2 = arith.cmpi ne, %1, %c0_i32_0 : i32
    scf.if %2 {
      %cst_20 = arith.constant 0.000000e+00 : f32
      %52 = vector.broadcast %cst_20 : f32 to vector<32x128xf32>
      %c0_21 = arith.constant 0 : index
      %c0_22 = arith.constant 0 : index
      %53 = vector.load %arg10[%c0_21, %c0_22] : memref<32x128xf32, #tpu.memory_space<vmem>>, vector<32x128xf32>
      tpu.vector_store %arg10[%c0_21, %c0_22], %52 {strides = array<i32>} : memref<32x128xf32, #tpu.memory_space<vmem>>, vector<32x128xf32>,
      %cst_23 = arith.constant 0.000000e+00 : f32
      %54 = vector.broadcast %cst_23 : f32 to vector<32x128xf32>
      %c0_24 = arith.constant 0 : index
      %c0_25 = arith.constant 0 : index
      %55 = vector.load %arg11[%c0_24, %c0_25] : memref<32x128xf32, #tpu.memory_space<vmem>>, vector<32x128xf32>
      tpu.vector_store %arg11[%c0_24, %c0_25], %54 {strides = array<i32>} : memref<32x128xf32, #tpu.memory_space<vmem>>, vector<32x128xf32>,
      %56 = tpu.iota {dimensions = array<i32: 0>} : vector<16x1xi32>
      %57 = arith.sitofp %56 : vector<16x1xi32> to vector<16x1xf32>
      %cst_26 = arith.constant 8.000000e+00 : f32
      %58 = vector.broadcast %cst_26 : f32 to vector<16x1xf32>
      %59 = arith.subf %57, %58 : vector<16x1xf32>
      %cst_27 = arith.constant 0.392699093 : f32
      %60 = vector.broadcast %cst_27 : f32 to vector<16x1xf32>
      %61 = arith.mulf %59, %60 : vector<16x1xf32>
      %c1 = arith.constant 1 : index
      %c0_28 = arith.constant 0 : index
      %62 = vector.load %arg3[%c1, %c0_28] : memref<2x128xf32, #tpu.memory_space<vmem>>, vector<1x128xf32>
      %63 = vector.broadcast %61 : vector<16x1xf32> to vector<16x128xf32>
      %64 = vector.broadcast %62 : vector<1x128xf32> to vector<16x128xf32>
      %65 = arith.mulf %63, %64 : vector<16x128xf32>
      %66 = math.cos %65 : vector<16x128xf32>
      %c0_29 = arith.constant 0 : index
      %c0_30 = arith.constant 0 : index
      %67 = vector.load %arg8[%c0_29, %c0_30] : memref<16x128xf32, #tpu.memory_space<vmem>>, vector<16x128xf32>
      tpu.vector_store %arg8[%c0_29, %c0_30], %66 {strides = array<i32>} : memref<16x128xf32, #tpu.memory_space<vmem>>, vector<16x128xf32>,
      %68 = math.sin %65 : vector<16x128xf32>
      %c0_31 = arith.constant 0 : index
      %c0_32 = arith.constant 0 : index
      %69 = vector.load %arg9[%c0_31, %c0_32] : memref<16x128xf32, #tpu.memory_space<vmem>>, vector<16x128xf32>
      tpu.vector_store %arg9[%c0_31, %c0_32], %68 {strides = array<i32>} : memref<16x128xf32, #tpu.memory_space<vmem>>, vector<16x128xf32>,
    } else {
    }
    %c8_i32 = arith.constant 8 : i32
    %3 = arith.muli %arg1, %c8_i32 : i32
    %4 = tpu.iota {dimensions = array<i32: 0>} : vector<8x1xi32>
    %5 = vector.broadcast %3 : i32 to vector<8x1xi32>
    %6 = arith.addi %5, %4 : vector<8x1xi32>
    %7 = arith.sitofp %6 : vector<8x1xi32> to vector<8x1xf32>
    %cst = arith.constant 8.000000e+00 : f32
    %8 = vector.broadcast %cst : f32 to vector<8x1xf32>
    %9 = arith.subf %7, %8 : vector<8x1xf32>
    %cst_1 = arith.constant 0.392699093 : f32
    %10 = vector.broadcast %cst_1 : f32 to vector<8x1xf32>
    %11 = arith.mulf %9, %10 : vector<8x1xf32>
    %c0 = arith.constant 0 : index
    %c0_2 = arith.constant 0 : index
    %12 = vector.load %arg3[%c0, %c0_2] : memref<2x128xf32, #tpu.memory_space<vmem>>, vector<1x128xf32>
    %13 = vector.broadcast %11 : vector<8x1xf32> to vector<8x128xf32>
    %14 = vector.broadcast %12 : vector<1x128xf32> to vector<8x128xf32>
    %15 = arith.mulf %13, %14 : vector<8x128xf32>
    %16 = math.cos %15 : vector<8x128xf32>
    %17 = vector.shape_cast %16 : vector<8x128xf32> to vector<8x1x128xf32>
    %18 = math.sin %15 : vector<8x128xf32>
    %19 = vector.shape_cast %18 : vector<8x128xf32> to vector<8x1x128xf32>
    %c0_3 = arith.constant 0 : index
    %c0_4 = arith.constant 0 : index
    %20 = vector.load %arg8[%c0_3, %c0_4] : memref<16x128xf32, #tpu.memory_space<vmem>>, vector<16x128xf32>
    %21 = vector.shape_cast %20 : vector<16x128xf32> to vector<1x16x128xf32>
    %c0_5 = arith.constant 0 : index
    %c0_6 = arith.constant 0 : index
    %22 = vector.load %arg9[%c0_5, %c0_6] : memref<16x128xf32, #tpu.memory_space<vmem>>, vector<16x128xf32>
    %23 = vector.shape_cast %22 : vector<16x128xf32> to vector<1x16x128xf32>
    %24 = vector.broadcast %17 : vector<8x1x128xf32> to vector<8x16x128xf32>
    %25 = vector.broadcast %21 : vector<1x16x128xf32> to vector<8x16x128xf32>
    %26 = arith.mulf %24, %25 : vector<8x16x128xf32>
    %27 = vector.broadcast %19 : vector<8x1x128xf32> to vector<8x16x128xf32>
    %28 = vector.broadcast %23 : vector<1x16x128xf32> to vector<8x16x128xf32>
    %29 = arith.mulf %27, %28 : vector<8x16x128xf32>
    %30 = arith.subf %26, %29 : vector<8x16x128xf32>
    %31 = vector.shape_cast %30 : vector<8x16x128xf32> to vector<128x128xf32>
    %32 = vector.broadcast %19 : vector<8x1x128xf32> to vector<8x16x128xf32>
    %33 = vector.broadcast %21 : vector<1x16x128xf32> to vector<8x16x128xf32>
    %34 = arith.mulf %32, %33 : vector<8x16x128xf32>
    %35 = vector.broadcast %17 : vector<8x1x128xf32> to vector<8x16x128xf32>
    %36 = vector.broadcast %23 : vector<1x16x128xf32> to vector<8x16x128xf32>
    %37 = arith.mulf %35, %36 : vector<8x16x128xf32>
    %38 = arith.addf %34, %37 : vector<8x16x128xf32>
    %39 = vector.shape_cast %38 : vector<8x16x128xf32> to vector<128x128xf32>
    %c0_7 = arith.constant 0 : index
    %c0_8 = arith.constant 0 : index
    %40 = vector.load %arg2[%c0_7, %c0_8] : memref<32x128xf32, #tpu.memory_space<vmem>>, vector<32x128xf32>
    %c0_9 = arith.constant 0 : index
    %c0_10 = arith.constant 0 : index
    %41 = vector.load %arg10[%c0_9, %c0_10] : memref<32x128xf32, #tpu.memory_space<vmem>>, vector<32x128xf32>
    %cst_11 = arith.constant dense<0.000000e+00> : vector<32x128xf32>
    %42 = tpu.matmul %40, %31, %cst_11 {dimension_numbers = #tpu.dot_dimension_numbers<[1], [0], [0], [1], [0, 0, 1, 1], [], []>} : vector<32x128xf32>, vector<128x128xf32>, vector<32x128xf32> -> vector<32x128xf32>
    %43 = arith.addf %41, %42 : vector<32x128xf32>
    %c0_12 = arith.constant 0 : index
    %c0_13 = arith.constant 0 : index
    %44 = vector.load %arg10[%c0_12, %c0_13] : memref<32x128xf32, #tpu.memory_space<vmem>>, vector<32x128xf32>
    tpu.vector_store %arg10[%c0_12, %c0_13], %43 {strides = array<i32>} : memref<32x128xf32, #tpu.memory_space<vmem>>, vector<32x128xf32>,
    %c0_14 = arith.constant 0 : index
    %c0_15 = arith.constant 0 : index
    %45 = vector.load %arg11[%c0_14, %c0_15] : memref<32x128xf32, #tpu.memory_space<vmem>>, vector<32x128xf32>
    %cst_16 = arith.constant dense<0.000000e+00> : vector<32x128xf32>
    %46 = tpu.matmul %40, %39, %cst_16 {dimension_numbers = #tpu.dot_dimension_numbers<[1], [0], [0], [1], [0, 0, 1, 1], [], []>} : vector<32x128xf32>, vector<128x128xf32>, vector<32x128xf32> -> vector<32x128xf32>
    %47 = arith.addf %45, %46 : vector<32x128xf32>
    %c0_17 = arith.constant 0 : index
    %c0_18 = arith.constant 0 : index
    %48 = vector.load %arg11[%c0_17, %c0_18] : memref<32x128xf32, #tpu.memory_space<vmem>>, vector<32x128xf32>
    tpu.vector_store %arg11[%c0_17, %c0_18], %47 {strides = array<i32>} : memref<32x128xf32, #tpu.memory_space<vmem>>, vector<32x128xf32>,
    %c1_i32 = arith.constant 1 : i32
    %49 = arith.cmpi eq, %arg1, %c1_i32 : i32
    %50 = arith.extui %49 : i1 to i32
    %c0_i32_19 = arith.constant 0 : i32
    %51 = arith.cmpi ne, %50, %c0_i32_19 : i32
    scf.if %51 {
      %c0_20 = arith.constant 0 : index
      %c0_21 = arith.constant 0 : index
      %52 = vector.load %arg10[%c0_20, %c0_21] : memref<32x128xf32, #tpu.memory_space<vmem>>, vector<32x128xf32>
      %c0_22 = arith.constant 0 : index
      %c0_23 = arith.constant 0 : index
      %53 = vector.load %arg11[%c0_22, %c0_23] : memref<32x128xf32, #tpu.memory_space<vmem>>, vector<32x128xf32>
      %54 = vector.extract_strided_slice %52 {offsets = [0, 0], sizes = [16, 128], strides = [1, 1]} : vector<32x128xf32> to vector<16x128xf32>
      %55 = vector.extract_strided_slice %53 {offsets = [16, 0], sizes = [16, 128], strides = [1, 1]} : vector<32x128xf32> to vector<16x128xf32>
      %56 = arith.addf %54, %55 : vector<16x128xf32>
      %57 = vector.shape_cast %56 : vector<16x128xf32> to vector<2x8x128xf32>
      %58 = vector.extract_strided_slice %52 {offsets = [16, 0], sizes = [16, 128], strides = [1, 1]} : vector<32x128xf32> to vector<16x128xf32>
      %59 = vector.extract_strided_slice %53 {offsets = [0, 0], sizes = [16, 128], strides = [1, 1]} : vector<32x128xf32> to vector<16x128xf32>
      %60 = arith.subf %58, %59 : vector<16x128xf32>
      %61 = vector.shape_cast %60 : vector<16x128xf32> to vector<2x8x128xf32>
      %c0_24 = arith.constant 0 : index
      %c0_25 = arith.constant 0 : index
      %62 = vector.load %arg4[%c0_24, %c0_25] : memref<2x128xf32, #tpu.memory_space<vmem>>, vector<2x128xf32>
      %63 = vector.shape_cast %62 : vector<2x128xf32> to vector<2x1x128xf32>
      %c0_26 = arith.constant 0 : index
      %c0_27 = arith.constant 0 : index
      %64 = vector.load %arg5[%c0_26, %c0_27] : memref<2x128xf32, #tpu.memory_space<vmem>>, vector<2x128xf32>
      %65 = vector.shape_cast %64 : vector<2x128xf32> to vector<2x1x128xf32>
      %66 = vector.broadcast %63 : vector<2x1x128xf32> to vector<2x8x128xf32>
      %67 = arith.mulf %57, %66 : vector<2x8x128xf32>
      %68 = vector.broadcast %65 : vector<2x1x128xf32> to vector<2x8x128xf32>
      %69 = arith.mulf %61, %68 : vector<2x8x128xf32>
      %70 = arith.subf %67, %69 : vector<2x8x128xf32>
      %cst_28 = arith.constant dense<0.000000e+00> : vector<8x128xf32>
      %71 = vector.multi_reduction <add>, %70, %cst_28 [0] : vector<2x8x128xf32> to vector<8x128xf32>
      %c0_29 = arith.constant 0 : index
      %c0_30 = arith.constant 0 : index
      %72 = vector.load %arg6[%c0_29, %c0_30] : memref<8x128xf32, #tpu.memory_space<vmem>>, vector<8x128xf32>
      tpu.vector_store %arg6[%c0_29, %c0_30], %71 {strides = array<i32>} : memref<8x128xf32, #tpu.memory_space<vmem>>, vector<8x128xf32>,
      %73 = vector.broadcast %65 : vector<2x1x128xf32> to vector<2x8x128xf32>
      %74 = arith.mulf %57, %73 : vector<2x8x128xf32>
      %75 = vector.broadcast %63 : vector<2x1x128xf32> to vector<2x8x128xf32>
      %76 = arith.mulf %61, %75 : vector<2x8x128xf32>
      %77 = arith.addf %74, %76 : vector<2x8x128xf32>
      %cst_31 = arith.constant dense<0.000000e+00> : vector<8x128xf32>
      %78 = vector.multi_reduction <add>, %77, %cst_31 [0] : vector<2x8x128xf32> to vector<8x128xf32>
      %c0_32 = arith.constant 0 : index
      %c0_33 = arith.constant 0 : index
      %79 = vector.load %arg7[%c0_32, %c0_33] : memref<8x128xf32, #tpu.memory_space<vmem>>, vector<8x128xf32>
      tpu.vector_store %arg7[%c0_32, %c0_33], %78 {strides = array<i32>} : memref<8x128xf32, #tpu.memory_space<vmem>>, vector<8x128xf32>,
    } else {
    }
    return
  }
  func.func @transform_0(%arg0: i32, %arg1: i32) -> (i32, i32) {
    %c0_i32 = arith.constant 0 : i32
    %c0_i32_0 = arith.constant 0 : i32
    return %c0_i32, %arg1 : i32, i32
  }
  func.func @transform_1(%arg0: i32, %arg1: i32) -> (i32, i32) {
    %c0_i32 = arith.constant 0 : i32
    %c0_i32_0 = arith.constant 0 : i32
    return %c0_i32, %arg0 : i32, i32
  }
  func.func @transform_2(%arg0: i32, %arg1: i32) -> (i32, i32) {
    %c0_i32 = arith.constant 0 : i32
    %c0_i32_0 = arith.constant 0 : i32
    return %c0_i32, %arg0 : i32, i32
  }
  func.func @transform_3(%arg0: i32, %arg1: i32) -> (i32, i32) {
    %c0_i32 = arith.constant 0 : i32
    %c0_i32_0 = arith.constant 0 : i32
    return %c0_i32, %arg0 : i32, i32
  }
  func.func @transform_4(%arg0: i32, %arg1: i32) -> (i32, i32) {
    %c0_i32 = arith.constant 0 : i32
    %c0_i32_0 = arith.constant 0 : i32
    return %c0_i32, %arg0 : i32, i32
  }
  func.func @transform_5(%arg0: i32, %arg1: i32) -> (i32, i32) {
    %c0_i32 = arith.constant 0 : i32
    %c0_i32_0 = arith.constant 0 : i32
    return %c0_i32, %arg0 : i32, i32
  }
}

</mosaic_0001>

<llo_original>
// kernel: tpu_custom_call.1
$region0: #{tpu_custom_call.1}
  #allocation0 [shape = 'u32[]', space=smem, size = 0x4, offset = 0x4, fixed_abs, tag = 'smem constant byte address 0x4 - core index']
  #allocation1 [shape = 'u32[144,128]{1,0:T(1,128)}', space=vmem, size = 0x12000, scoped, tag = 'internal scratch']
  #allocation2 [shape = 'f32[16,128]{1,0:T(8,128)}', space=vmem, size = 0x2000, scoped, tag = 'scratch operand']
  #allocation3 [shape = 'f32[16,128]{1,0:T(8,128)}', space=vmem, size = 0x2000, scoped, tag = 'scratch operand']
  #allocation4 [shape = 'f32[32,128]{1,0:T(8,128)}', space=vmem, size = 0x4000, scoped, tag = 'scratch operand']
  #allocation5 [shape = 'f32[32,128]{1,0:T(8,128)}', space=vmem, size = 0x4000, scoped, tag = 'scratch operand']
  %s0 = inlined_call_operand.hbm [shape: f32[32,256], index: 0, kind: input, shape index: {}]
  %s1 = inlined_call_operand.hbm [shape: f32[2,256], index: 1, kind: input, shape index: {}]
  %s2 = inlined_call_operand.vmem [shape: f32[2,256], index: 2, kind: input, shape index: {}]
  %s3 = inlined_call_operand.vmem [shape: f32[2,256], index: 3, kind: input, shape index: {}]
  %s4 = inlined_call_operand.hbm [shape: f32[8,256], index: 4, kind: output, shape index: {0}]
  %s5 = inlined_call_operand.hbm [shape: f32[8,256], index: 5, kind: output, shape index: {1}]
  %6 = xla_tuple %s4, %s5
  %s7 = sld [smem:[#allocation0]]
  $region73: #{tpu_custom_call.1} parent=0
    _
  %s9 = ssub.s32 1, %s7
  %s10 = scalar_select 0, %s9, %s7
  $region1: #{tpu_custom_call.1} parent=0
    #allocation6 [shape = 'u8[32768]{0}', space=vmem, size = 0x8000, scoped, tag = 'input window, operand 0']
    #allocation7 [shape = 's32[2]{0}', space=sflag, size = 0x8, scoped, tag = 'scoped memory for tpu_custom_call.1']
    #allocation8 [shape = 's32[2]{0}', space=sflag, size = 0x8, scoped, tag = 'scoped memory for tpu_custom_call.1']
    #allocation9 [shape = 'u8[2048]{0}', space=vmem, size = 0x800, scoped, tag = 'input window, operand 1']
    #allocation10 [shape = 's32[2]{0}', space=sflag, size = 0x8, scoped, tag = 'scoped memory for tpu_custom_call.1']
    #allocation11 [shape = 'u8[8192]{0}', space=vmem, size = 0x2000, scoped, tag = 'output window, operand 0']
    #allocation12 [shape = 'u8[8192]{0}', space=vmem, size = 0x2000, scoped, tag = 'output window, operand 1']
    #allocation13 [shape = 's32[2]{0}', space=sflag, size = 0x8, scoped, tag = 'scoped memory for tpu_custom_call.1']
    %11 = vsyncpa [#allocation7], 0
    %s12 = scalar_lea.sflag [#allocation7], 1
    %13 = vsyncpa %s12, 0
    %14 = vsyncpa [#allocation10], 0
    %s15 = scalar_lea.sflag [#allocation10], 1
    %16 = vsyncpa %s15, 0
    %17 = vsyncpa [#allocation8], 0
    %s18 = scalar_lea.sflag [#allocation8], 1
    %19 = vsyncpa %s18, 0
    %20 = vsyncpa [#allocation13], 0
    %s21 = scalar_lea.sflag [#allocation13], 1
    %22 = vsyncpa %s21, 0
    loop: start=0, step=1, limit=6
    $region2: #{tpu_custom_call.1} parent=1 // loop_pre_header
      _
    $region3: #{tpu_custom_call.1} parent=1 // loop_header
      %s24 = sphi 0, %s28
      %p25 = scmp.ge.s32.totalorder %s24, 6
      %s31 = sphi 0, %s43
      %s32 = sphi 0, %s39
      %s33 = sphi 0, %s31
      %s34 = sphi 0, %s32
      %s35 = sphi 0, %s33
      %s36 = sphi 0, %s34
      %s46 = sphi 0, %s48
      %s49 = sphi 0, %s46
      %s50 = sphi 0, %s49
      %s66 = sphi 0, %s50
      %s72 = sphi 0, %s74
      %s75 = sphi 0, %s72
      %s76 = sphi 0, %s75
      %s92 = sphi 0, %s76
      %s98 = sphi 0, %s100
      %s101 = sphi 0, %s98
      %s102 = sphi 0, %s101
      %s118 = sphi 0, %s102
      %s124 = sphi 0, %s126
      %s127 = sphi 0, %s124
      %s128 = sphi 0, %s127
      %s144 = sphi 0, %s128
      %s150 = sphi 0, %s152
      %s153 = sphi 0, %s150
      %s154 = sphi 0, %s153
      %s170 = sphi 0, %s154
      %s176 = sphi 0, %s178
      %s179 = sphi 0, %s176
      %s180 = sphi 0, %s179
      %s196 = sphi 0, %s180
    $region4: #{tpu_custom_call.1} parent=1 // loop_header_branch
      %27 = sbr.rel (%p25) target = $region8
    $region5: #{tpu_custom_call.1} parent=1 // loop_body
      %s29 = ssub.s32 %s24, 1
      %s30 = ssub.s32 %s24, 2
      %s37 = sadd.s32 1, %s32
      %p38 = scmp.ge.s32.totalorder %s37, 2
      %s39 = scalar_select %p38, 0, %s37
      %s40 = sadd.s32 1, %s31
      %s41 = scalar_select %p38, %s40, %s31
      %p42 = scmp.ge.s32.totalorder %s41, 2
      %s43 = scalar_select %p42, 0, %s41
      %s44 = ssub.s32 %s32, %s39
      %p45 = scmp.eq.s32.totalorder %s44, 0
      %s47 = sadd.s32 %s46, 1
      %s48 = scalar_select %p45, %s46, %s47
      %p51 = pneg %p45
      %p52 = scmp.eq.s32.totalorder %s24, 3
      %p53 = por %p51, %p52
      %p54 = scmp.ne.s32.totalorder %s46, %s49
      %p55 = scmp.eq.s32.totalorder %s24, 0
      %p56 = por %p54, %p55
      %p57 = scmp.ne.s32.totalorder %s46, %s49
      %p58 = scmp.eq.s32.totalorder %s29, 3
      %p59 = por %p57, %p58
      %p60 = scmp.ne.s32.totalorder %s49, %s50
      %p61 = scmp.eq.s32.totalorder %s29, 0
      %p62 = por %p60, %p61
      %p63 = scmp.ne.s32.totalorder %s49, %s50
      %p64 = scmp.eq.s32.totalorder %s30, 3
      %p65 = por %p63, %p64
      %p67 = scmp.ne.s32.totalorder %s50, %s66
      %p68 = scmp.eq.s32.totalorder %s30, 0
      %p69 = por %p67, %p68
      %s70 = ssub.s32 %s31, %s43
      %p71 = scmp.eq.s32.totalorder %s70, 0
      %s73 = sadd.s32 %s72, 1
      %s74 = scalar_select %p71, %s72, %s73
      %p77 = pneg %p71
      %p78 = scmp.eq.s32.totalorder %s24, 3
      %p79 = por %p77, %p78
      %p80 = scmp.ne.s32.totalorder %s72, %s75
      %p81 = scmp.eq.s32.totalorder %s24, 0
      %p82 = por %p80, %p81
      %p83 = scmp.ne.s32.totalorder %s72, %s75
      %p84 = scmp.eq.s32.totalorder %s29, 3
      %p85 = por %p83, %p84
      %p86 = scmp.ne.s32.totalorder %s75, %s76
      %p87 = scmp.eq.s32.totalorder %s29, 0
      %p88 = por %p86, %p87
      %p89 = scmp.ne.s32.totalorder %s75, %s76
      %p90 = scmp.eq.s32.totalorder %s30, 3
      %p91 = por %p89, %p90
      %p93 = scmp.ne.s32.totalorder %s76, %s92
      %p94 = scmp.eq.s32.totalorder %s30, 0
      %p95 = por %p93, %p94
      %s96 = ssub.s32 %s31, %s43
      %p97 = scmp.eq.s32.totalorder %s96, 0
      %s99 = sadd.s32 %s98, 1
      %s100 = scalar_select %p97, %s98, %s99
      %p103 = pneg %p97
      %p104 = scmp.eq.s32.totalorder %s24, 3
      %p105 = por %p103, %p104
      %p106 = scmp.ne.s32.totalorder %s98, %s101
      %p107 = scmp.eq.s32.totalorder %s24, 0
      %p108 = por %p106, %p107
      %p109 = scmp.ne.s32.totalorder %s98, %s101
      %p110 = scmp.eq.s32.totalorder %s29, 3
      %p111 = por %p109, %p110
      %p112 = scmp.ne.s32.totalorder %s101, %s102
      %p113 = scmp.eq.s32.totalorder %s29, 0
      %p114 = por %p112, %p113
      %p115 = scmp.ne.s32.totalorder %s101, %s102
      %p116 = scmp.eq.s32.totalorder %s30, 3
      %p117 = por %p115, %p116
      %p119 = scmp.ne.s32.totalorder %s102, %s118
      %p120 = scmp.eq.s32.totalorder %s30, 0
      %p121 = por %p119, %p120
      %s122 = ssub.s32 %s31, %s43
      %p123 = scmp.eq.s32.totalorder %s122, 0
      %s125 = sadd.s32 %s124, 1
      %s126 = scalar_select %p123, %s124, %s125
      %p129 = pneg %p123
      %p130 = scmp.eq.s32.totalorder %s24, 3
      %p131 = por %p129, %p130
      %p132 = scmp.ne.s32.totalorder %s124, %s127
      %p133 = scmp.eq.s32.totalorder %s24, 0
      %p134 = por %p132, %p133
      %p135 = scmp.ne.s32.totalorder %s124, %s127
      %p136 = scmp.eq.s32.totalorder %s29, 3
      %p137 = por %p135, %p136
      %p138 = scmp.ne.s32.totalorder %s127, %s128
      %p139 = scmp.eq.s32.totalorder %s29, 0
      %p140 = por %p138, %p139
      %p141 = scmp.ne.s32.totalorder %s127, %s128
      %p142 = scmp.eq.s32.totalorder %s30, 3
      %p143 = por %p141, %p142
      %p145 = scmp.ne.s32.totalorder %s128, %s144
      %p146 = scmp.eq.s32.totalorder %s30, 0
      %p147 = por %p145, %p146
      %s148 = ssub.s32 %s31, %s43
      %p149 = scmp.eq.s32.totalorder %s148, 0
      %s151 = sadd.s32 %s150, 1
      %s152 = scalar_select %p149, %s150, %s151
      %p155 = pneg %p149
      %p156 = scmp.eq.s32.totalorder %s24, 3
      %p157 = por %p155, %p156
      %p158 = scmp.ne.s32.totalorder %s150, %s153
      %p159 = scmp.eq.s32.totalorder %s24, 0
      %p160 = por %p158, %p159
      %p161 = scmp.ne.s32.totalorder %s150, %s153
      %p162 = scmp.eq.s32.totalorder %s29, 3
      %p163 = por %p161, %p162
      %p164 = scmp.ne.s32.totalorder %s153, %s154
      %p165 = scmp.eq.s32.totalorder %s29, 0
      %p166 = por %p164, %p165
      %p167 = scmp.ne.s32.totalorder %s153, %s154
      %p168 = scmp.eq.s32.totalorder %s30, 3
      %p169 = por %p167, %p168
      %p171 = scmp.ne.s32.totalorder %s154, %s170
      %p172 = scmp.eq.s32.totalorder %s30, 0
      %p173 = por %p171, %p172
      %s174 = ssub.s32 %s31, %s43
      %p175 = scmp.eq.s32.totalorder %s174, 0
      %s177 = sadd.s32 %s176, 1
      %s178 = scalar_select %p175, %s176, %s177
      %p181 = pneg %p175
      %p182 = scmp.eq.s32.totalorder %s24, 3
      %p183 = por %p181, %p182
      %p184 = scmp.ne.s32.totalorder %s176, %s179
      %p185 = scmp.eq.s32.totalorder %s24, 0
      %p186 = por %p184, %p185
      %p187 = scmp.ne.s32.totalorder %s176, %s179
      %p188 = scmp.eq.s32.totalorder %s29, 3
      %p189 = por %p187, %p188
      %p190 = scmp.ne.s32.totalorder %s179, %s180
      %p191 = scmp.eq.s32.totalorder %s29, 0
      %p192 = por %p190, %p191
      %p193 = scmp.ne.s32.totalorder %s179, %s180
      %p194 = scmp.eq.s32.totalorder %s30, 3
      %p195 = por %p193, %p194
      %p197 = scmp.ne.s32.totalorder %s180, %s196
      %p198 = scmp.eq.s32.totalorder %s30, 0
      %p199 = por %p197, %p198
      %p200 = scmp.le.s32.totalorder 1, %s24
      %p201 = scmp.lt.s32.totalorder %s24, 5
      %p202 = pnand %p200, %p201
      %p203 = pneg %p202
      // Predicated region
      $region9: #{tpu_custom_call.1} parent=5 // pred_check
        _
      $region10: #{tpu_custom_call.1} parent=5 // pred_check_branch
        %205 = sbr.rel (%p202) target = $region12
      $region11: #{tpu_custom_call.1} parent=5 // pred_region
        %s206 = ssub.s32 %s24, 1
      $region12: #{tpu_custom_call.1} parent=5 // pred_fallthru
        _
      %p207 = scmp.lt.s32.totalorder %s24, 4
      // Predicated region
      $region13: #{tpu_custom_call.1} parent=5 // pred_check
        %p208 = pneg %p207
      $region14: #{tpu_custom_call.1} parent=5 // pred_check_branch
        %210 = sbr.rel (%p208) target = $region16
      $region15: #{tpu_custom_call.1} parent=5 // pred_region
        // Predicated region
        $region17: #{tpu_custom_call.1} parent=15 // pred_check
          %p211 = pneg %p56
        $region18: #{tpu_custom_call.1} parent=15 // pred_check_branch
          %213 = sbr.rel (%p211) target = $region20
        $region19: #{tpu_custom_call.1} parent=15 // pred_region
          %s214 = sand.u32 %s46, 1
          %s215 = scalar_lea.sflag [#allocation7], %s214
          %s216 = sand.u32 %s46, 1
          %s217 = smul.addr %s216, 32
          %s218 = scalar_lea.vmem [#allocation6], %s217
          %s220 = ssub.s32 512, 512
          %221 = vsyncadd %s215, %s220
          %s222 = smul.addr %s32, 128
          %s223 = scalar_lea.hbm %s0, %s222
          %s224 = sshll.u32 %s218, 4
          %s225 = int_to_ptr.vmem [resolvable:$true] %s224
          %230 = dma.hbm_to_vmem [thread:$0]  %s223, 512, %s225, %s215, 256, 128, 8
        $region20: #{tpu_custom_call.1} parent=15 // pred_fallthru
          _
        // Predicated region
        $region21: #{tpu_custom_call.1} parent=15 // pred_check
          %p231 = pneg %p82
        $region22: #{tpu_custom_call.1} parent=15 // pred_check_branch
          %233 = sbr.rel (%p231) target = $region24
        $region23: #{tpu_custom_call.1} parent=15 // pred_region
          %s234 = sand.u32 %s72, 1
          %s235 = scalar_lea.sflag [#allocation10], %s234
          %s236 = sand.u32 %s72, 1
          %s237 = smul.addr %s236, 2
          %s238 = scalar_lea.vmem [#allocation9], %s237
          %s240 = ssub.s32 32, 32
          %241 = vsyncadd %s235, %s240
          %s242 = smul.addr %s31, 32
          %s243 = scalar_lea.hbm %s1, %s242
          %s245 = sshll.u32 %s238, 4
          %s246 = int_to_ptr.vmem [resolvable:$true] %s245
          %248 = dma.hbm_to_vmem [thread:$0]  %s243, 32, %s246, %s235
        $region24: #{tpu_custom_call.1} parent=15 // pred_fallthru
          _
        // Predicated region
        $region25: #{tpu_custom_call.1} parent=15 // pred_check
          %p249 = pneg %p108
        $region26: #{tpu_custom_call.1} parent=15 // pred_check_branch
          %251 = sbr.rel (%p249) target = $region28
        $region27: #{tpu_custom_call.1} parent=15 // pred_region
          %p252 = scmp.lt.s32.totalorder %s31, 1
          %s253 = scalar_select %p252, %s31, 1
          %s254 = smul.addr %s253, 2
          %s255 = scalar_lea.vmem %s2, %s254
        $region28: #{tpu_custom_call.1} parent=15 // pred_fallthru
          _
        // Predicated region
        $region29: #{tpu_custom_call.1} parent=15 // pred_check
          %p256 = pneg %p134
        $region30: #{tpu_custom_call.1} parent=15 // pred_check_branch
          %258 = sbr.rel (%p256) target = $region32
        $region31: #{tpu_custom_call.1} parent=15 // pred_region
          %p259 = scmp.lt.s32.totalorder %s31, 1
          %s260 = scalar_select %p259, %s31, 1
          %s261 = smul.addr %s260, 2
          %s262 = scalar_lea.vmem %s3, %s261
        $region32: #{tpu_custom_call.1} parent=15 // pred_fallthru
          _
      $region16: #{tpu_custom_call.1} parent=5 // pred_fallthru
        _
      %p263 = scmp.le.s32.totalorder 1, %s24
      %p264 = scmp.lt.s32.totalorder %s24, 5
      %p265 = pnand %p263, %p264
      %p266 = pneg %p265
      // Predicated region
      $region33: #{tpu_custom_call.1} parent=5 // pred_check
        _
      $region34: #{tpu_custom_call.1} parent=5 // pred_check_branch
        %268 = sbr.rel (%p265) target = $region36
      $region35: #{tpu_custom_call.1} parent=5 // pred_region
        %s269 = ssub.s32 %s24, 1
        %s270 = sand.u32 %s49, 1
        %s271 = scalar_lea.sflag [#allocation7], %s270
        %s272 = sand.u32 %s49, 1
        %s273 = smul.addr %s272, 32
        %s274 = scalar_lea.vmem [#allocation6], %s273
        // Predicated region
        $region37: #{tpu_custom_call.1} parent=35 // pred_check
          %p275 = pneg %p62
        $region38: #{tpu_custom_call.1} parent=35 // pred_check_branch
          %277 = sbr.rel (%p275) target = $region40
        $region39: #{tpu_custom_call.1} parent=35 // pred_region
          %278 = dma.done %s271, 512
        $region40: #{tpu_custom_call.1} parent=35 // pred_fallthru
          _
        %s279 = sand.u32 %s75, 1
        %s280 = scalar_lea.sflag [#allocation10], %s279
        %s281 = sand.u32 %s75, 1
        %s282 = smul.addr %s281, 2
        %s283 = scalar_lea.vmem [#allocation9], %s282
        // Predicated region
        $region41: #{tpu_custom_call.1} parent=35 // pred_check
          %p284 = pneg %p88
        $region42: #{tpu_custom_call.1} parent=35 // pred_check_branch
          %286 = sbr.rel (%p284) target = $region44
        $region43: #{tpu_custom_call.1} parent=35 // pred_region
          %287 = dma.done %s280, 32
        $region44: #{tpu_custom_call.1} parent=35 // pred_fallthru
          _
        %s288 = sand.u32 %s49, 1
        %s289 = scalar_lea.sflag [#allocation7], %s288
        %s290 = sand.u32 %s49, 1
        %s291 = smul.addr %s290, 32
        %s292 = scalar_lea.vmem [#allocation6], %s291
        %p293 = pneg %p62
        %p294 = pneg %p59
        %s295 = sand.u32 %s75, 1
        %s296 = scalar_lea.sflag [#allocation10], %s295
        %s297 = sand.u32 %s75, 1
        %s298 = smul.addr %s297, 2
        %s299 = scalar_lea.vmem [#allocation9], %s298
        %p300 = pneg %p88
        %p301 = pneg %p85
        %p302 = scmp.lt.s32.totalorder %s33, 1
        %s303 = scalar_select %p302, %s33, 1
        %s304 = smul.addr %s303, 2
        %s305 = scalar_lea.vmem %s2, %s304
        %p306 = pneg %p114
        %p307 = pneg %p111
        %p308 = scmp.lt.s32.totalorder %s33, 1
        %s309 = scalar_select %p308, %s33, 1
        %s310 = smul.addr %s309, 2
        %s311 = scalar_lea.vmem %s3, %s310
        %p312 = pneg %p140
        %p313 = pneg %p137
        %p314 = pneg %p166
        %p315 = pneg %p163
        %s316 = sand.u32 %s153, 1
        %s317 = scalar_lea.sflag [#allocation8], %s316
        %s318 = sand.u32 %s153, 1
        %s319 = smul.addr %s318, 8
        %s320 = scalar_lea.vmem [#allocation11], %s319
        %p321 = pneg %p192
        %p322 = pneg %p189
        %s323 = sand.u32 %s179, 1
        %s324 = scalar_lea.sflag [#allocation13], %s323
        %s325 = sand.u32 %s179, 1
        %s326 = smul.addr %s325, 8
        %s327 = scalar_lea.vmem [#allocation12], %s326
        %p328 = scmp.lt.s32.totalorder %s33, 1
        %s329 = scalar_select %p328, %s33, 1
        %s330 = smul.addr %s329, 2
        %s331 = scalar_lea.vmem %s2, %s330
        %p332 = scmp.lt.s32.totalorder %s33, 1
        %s333 = scalar_select %p332, %s33, 1
        %s334 = smul.addr %s333, 2
        %s335 = scalar_lea.vmem %s3, %s334
        %p336 = scmp.eq.s32.totalorder %s34, 0
        // Predicated region
        $region45: #{tpu_custom_call.1} parent=35 // pred_check
          %p337 = pneg %p336
        $region46: #{tpu_custom_call.1} parent=35 // pred_check_branch
          %339 = sbr.rel (%p337) target = $region48
        $region47: #{tpu_custom_call.1} parent=35 // pred_region
          %340 = vst [vmem:[#allocation4] sm:$0xff] 0.0
          %341 = vst [vmem:[#allocation4 + $0x8] sm:$0xff] 0.0
          %342 = vst [vmem:[#allocation4 + $0x10] sm:$0xff] 0.0
          %343 = vst [vmem:[#allocation4 + $0x18] sm:$0xff] 0.0
          %344 = vst [vmem:[#allocation5] sm:$0xff] 0.0
          %345 = vst [vmem:[#allocation5 + $0x8] sm:$0xff] 0.0
          %346 = vst [vmem:[#allocation5 + $0x10] sm:$0xff] 0.0
          %347 = vst [vmem:[#allocation5 + $0x18] sm:$0xff] 0.0
          %v348 = vlaneseq
          %v349 = vshrl.u32 %v348, 7
          %v350 = vadd.s32 %v349, 8
          %v351 = vcvt.s32.f32 %v349
          %v352 = vcvt.s32.f32 %v350
          %v353 = vsub.f32 %v351, 8.0
          %v354 = vsub.f32 %v352, 8.0
          %v355 = vmul.f32 %v353, 0.3926991
          %v356 = vmul.f32 %v354, 0.3926991
          %v357 = vld [vmem:[%s283 + $0x1] sm:$0x1]
          %v358 = vlaneseq
          %v359 = vshrl.u32 %v358, 7
          %v360 = vsub.s32 0, %v359
          %v361 = vrot.slane %v357, %v360
          %v362 = vmul.f32 %v355, %v361
          %v363 = vmul.f32 %v356, %v361
          %v364 = vand.u32 2147483647, %v362
          %vm365 = vcmp.le.f32.partialorder %v364, 0.7853982
          %vm366 = vcmp.lt.s32.totalorder %v362, 0
          %v367 = vand.u32 %v362, 2139095040
          %v368 = vshrl.u32 %v367, 23
          %v369 = vsub.s32 %v368, 127
          %v370 = vand.u32 2147483647, %v362
          %v371 = vand.u32 %v370, 8388607
          %v372 = vor.u32 %v371, 8388608
          %v373 = vsub.s32 0, %v372
          %v374 = vadd.s32 %v369, 1
          %vm375 = vcmp.gt.s32.totalorder %v374, 0
          %v376 = vsel %vm375, %v374, 0
          %v377 = vshrl.u32 %v376, 5
          %v378 = vand.u32 %v376, 31
          %v379 = vsub.s32 32, %v378
          %v380 = vshrl.u32 683565275, %v379
          %v381 = vshll.u32 683565275, %v378
          %v382 = vshrl.u32 2475754826, %v379
          %v383 = vor.u32 %v381, %v382
          %v384 = vshll.u32 2475754826, %v378
          %v385 = vshrl.u32 2131351028, %v379
          %v386 = vor.u32 %v384, %v385
          %v387 = vshll.u32 2131351028, %v378
          %v388 = vshrl.u32 2102212464, %v379
          %v389 = vor.u32 %v387, %v388
          %v390 = vshll.u32 2102212464, %v378
          %v391 = vshrl.u32 920167782, %v379
          %v392 = vor.u32 %v390, %v391
          %v393 = vshll.u32 920167782, %v378
          %v394 = vshrl.u32 1326507024, %v379
          %v395 = vor.u32 %v393, %v394
          %vm396 = vcmp.lt.s32.totalorder %v377, 1
          %vm397 = vcmp.lt.s32.totalorder %v377, 2
          %vm398 = vcmp.lt.s32.totalorder %v377, 3
          %vm399 = vcmp.lt.s32.totalorder %v377, 4
          %v400 = vsel %vm396, %v380, %v383
          %v401 = vsel %vm399, %v389, 2102212464
          %v402 = vsel %vm398, %v386, %v401
          %v403 = vsel %vm397, %v400, %v402
          %v404 = vsel %vm396, %v383, %v386
          %v405 = vsel %vm399, %v392, 920167782
          %v406 = vsel %vm398, %v389, %v405
          %v407 = vsel %vm397, %v404, %v406
          %v408 = vsel %vm396, %v386, %v389
          %v409 = vsel %vm399, %v395, 1326507024
          %v410 = vsel %vm398, %v392, %v409
          %v411 = vsel %vm397, %v408, %v410
          %v412 = vshll.u32 %v372, 8
          %v413 = vmul.u32.u64.compose %v412, %v411
          %v414 = vextract.low.u32 %v413
          %v415 = vextract.high.u32 %v413
          %v416 = vmul.u32.u64.compose %v412, %v407
          %v417 = vextract.low.u32 %v416
          %v418 = vextract.high.u32 %v416
          %v419 = vmul.u32 %v412, %v403
          %v420 = vadd.s32 %v415, %v417
          %vm421 = vc.u32 %v415, %v417
          %v422 = vadd.s32 %v418, 1
          %v423 = vsel %vm421, %v422, %v418
          %v424 = vadd.s32 %v419, %v423
          %v425 = vadd.s32 %v424, 536870912
          %v426 = vshrl.u32 %v425, 30
          %v427 = vshll.u32 %v426, 30
          %v428 = vsub.s32 %v424, %v427
          %vm429 = vcmp.lt.s32.totalorder %v428, 0
          %v430 = vsub.s32 0, %v428
          %v431 = vsel %vm429, %v430, %v428
          %v432 = vclz %v431
          %v433 = vsub.s32 %v432, 2
          %vm434 = vcmp.gt.s32.totalorder 0, %v433
          %v435 = vsel %vm434, 0, %v433
          %v436 = vsub.s32 32, %v435
          %v437 = vshll.u32 %v428, %v435
          %v438 = vshrl.u32 %v420, %v436
          %v439 = vor.u32 %v437, %v438
          %v440 = vsub.s32 4294967266, %v435
          %v441 = vadd.s32 %v440, 127
          %v442 = vshll.u32 %v441, 23
          %v443 = vor.u32 4788187, %v442
          %v444 = vand.u32 2147483647, %v443
          %v446 = vcvt.s32.f32 %v439
          %v447 = vmul.f32 %v446, %v444
          %v448 = vxor.u32 %v447, 2147483648
          %v449 = vsel %vm366, %v448, %v447
          %v450 = vsub.s32 4, %v426
          %v451 = vsel %vm366, %v450, %v426
          %v452 = vsel %vm365, %v362, %v449
          %v453 = vsel %vm365, 0, %v451
          %v454 = vcosq.f32.pop %v452
          %v455 = vsinq.f32.pop %v452
          %vm456 = vweird.f32 %v362
          %v457 = vand.u32 %v453, 3
          %vm458 = vcmp.lt.s32.totalorder %v457, 2
          %vm459 = vcmp.eq.s32.totalorder %v457, 0
          %v460 = vxor.u32 %v455, 2147483648
          %v461 = vsel %vm459, %v454, %v460
          %vm462 = vcmp.eq.s32.totalorder %v457, 2
          %v463 = vxor.u32 %v454, 2147483648
          %v464 = vsel %vm462, %v463, %v455
          %v465 = vsel %vm458, %v461, %v464
          %v466 = vsel %vm456, nan, %v465
          %v467 = vand.u32 2147483647, %v363
          %vm468 = vcmp.le.f32.partialorder %v467, 0.7853982
          %vm469 = vcmp.lt.s32.totalorder %v363, 0
          %v470 = vand.u32 %v363, 2139095040
          %v471 = vshrl.u32 %v470, 23
          %v472 = vsub.s32 %v471, 127
          %v473 = vand.u32 2147483647, %v363
          %v474 = vand.u32 %v473, 8388607
          %v475 = vor.u32 %v474, 8388608
          %v476 = vsub.s32 0, %v475
          %v477 = vadd.s32 %v472, 1
          %vm478 = vcmp.gt.s32.totalorder %v477, 0
          %v479 = vsel %vm478, %v477, 0
          %v480 = vshrl.u32 %v479, 5
          %v481 = vand.u32 %v479, 31
          %v482 = vsub.s32 32, %v481
          %v483 = vshrl.u32 683565275, %v482
          %v484 = vshll.u32 683565275, %v481
          %v485 = vshrl.u32 2475754826, %v482
          %v486 = vor.u32 %v484, %v485
          %v487 = vshll.u32 2475754826, %v481
          %v488 = vshrl.u32 2131351028, %v482
          %v489 = vor.u32 %v487, %v488
          %v490 = vshll.u32 2131351028, %v481
          %v491 = vshrl.u32 2102212464, %v482
          %v492 = vor.u32 %v490, %v491
          %v493 = vshll.u32 2102212464, %v481
          %v494 = vshrl.u32 920167782, %v482
          %v495 = vor.u32 %v493, %v494
          %v496 = vshll.u32 920167782, %v481
          %v497 = vshrl.u32 1326507024, %v482
          %v498 = vor.u32 %v496, %v497
          %vm499 = vcmp.lt.s32.totalorder %v480, 1
          %vm500 = vcmp.lt.s32.totalorder %v480, 2
          %vm501 = vcmp.lt.s32.totalorder %v480, 3
          %vm502 = vcmp.lt.s32.totalorder %v480, 4
          %v503 = vsel %vm499, %v483, %v486
          %v504 = vsel %vm502, %v492, 2102212464
          %v505 = vsel %vm501, %v489, %v504
          %v506 = vsel %vm500, %v503, %v505
          %v507 = vsel %vm499, %v486, %v489
          %v508 = vsel %vm502, %v495, 920167782
          %v509 = vsel %vm501, %v492, %v508
          %v510 = vsel %vm500, %v507, %v509
          %v511 = vsel %vm499, %v489, %v492
          %v512 = vsel %vm502, %v498, 1326507024
          %v513 = vsel %vm501, %v495, %v512
          %v514 = vsel %vm500, %v511, %v513
          %v515 = vshll.u32 %v475, 8
          %v516 = vmul.u32.u64.compose %v515, %v514
          %v517 = vextract.low.u32 %v516
          %v518 = vextract.high.u32 %v516
          %v519 = vmul.u32.u64.compose %v515, %v510
          %v520 = vextract.low.u32 %v519
          %v521 = vextract.high.u32 %v519
          %v522 = vmul.u32 %v515, %v506
          %v523 = vadd.s32 %v518, %v520
          %vm524 = vc.u32 %v518, %v520
          %v525 = vadd.s32 %v521, 1
          %v526 = vsel %vm524, %v525, %v521
          %v527 = vadd.s32 %v522, %v526
          %v528 = vadd.s32 %v527, 536870912
          %v529 = vshrl.u32 %v528, 30
          %v530 = vshll.u32 %v529, 30
          %v531 = vsub.s32 %v527, %v530
          %vm532 = vcmp.lt.s32.totalorder %v531, 0
          %v533 = vsub.s32 0, %v531
          %v534 = vsel %vm532, %v533, %v531
          %v535 = vclz %v534
          %v536 = vsub.s32 %v535, 2
          %vm537 = vcmp.gt.s32.totalorder 0, %v536
          %v538 = vsel %vm537, 0, %v536
          %v539 = vsub.s32 32, %v538
          %v540 = vshll.u32 %v531, %v538
          %v541 = vshrl.u32 %v523, %v539
          %v542 = vor.u32 %v540, %v541
          %v543 = vsub.s32 4294967266, %v538
          %v544 = vadd.s32 %v543, 127
          %v545 = vshll.u32 %v544, 23
          %v546 = vor.u32 4788187, %v545
          %v547 = vand.u32 2147483647, %v546
          %v549 = vcvt.s32.f32 %v542
          %v550 = vmul.f32 %v549, %v547
          %v551 = vxor.u32 %v550, 2147483648
          %v552 = vsel %vm469, %v551, %v550
          %v553 = vsub.s32 4, %v529
          %v554 = vsel %vm469, %v553, %v529
          %v555 = vsel %vm468, %v363, %v552
          %v556 = vsel %vm468, 0, %v554
          %v557 = vcosq.f32.pop %v555
          %v558 = vsinq.f32.pop %v555
          %vm559 = vweird.f32 %v363
          %v560 = vand.u32 %v556, 3
          %vm561 = vcmp.lt.s32.totalorder %v560, 2
          %vm562 = vcmp.eq.s32.totalorder %v560, 0
          %v563 = vxor.u32 %v558, 2147483648
          %v564 = vsel %vm562, %v557, %v563
          %vm565 = vcmp.eq.s32.totalorder %v560, 2
          %v566 = vxor.u32 %v557, 2147483648
          %v567 = vsel %vm565, %v566, %v558
          %v568 = vsel %vm561, %v564, %v567
          %v569 = vsel %vm559, nan, %v568
          %570 = vst [vmem:[#allocation2] sm:$0xff] %v466
          %571 = vst [vmem:[#allocation2 + $0x8] sm:$0xff] %v569
          %v572 = vand.u32 2147483647, %v362
          %vm573 = vcmp.le.f32.partialorder %v572, 0.7853982
          %vm574 = vcmp.lt.s32.totalorder %v362, 0
          %v575 = vand.u32 %v362, 2139095040
          %v576 = vshrl.u32 %v575, 23
          %v577 = vsub.s32 %v576, 127
          %v578 = vand.u32 2147483647, %v362
          %v579 = vand.u32 %v578, 8388607
          %v580 = vor.u32 %v579, 8388608
          %v581 = vsub.s32 0, %v580
          %v582 = vadd.s32 %v577, 1
          %vm583 = vcmp.gt.s32.totalorder %v582, 0
          %v584 = vsel %vm583, %v582, 0
          %v585 = vshrl.u32 %v584, 5
          %v586 = vand.u32 %v584, 31
          %v587 = vsub.s32 32, %v586
          %v588 = vshrl.u32 683565275, %v587
          %v589 = vshll.u32 683565275, %v586
          %v590 = vshrl.u32 2475754826, %v587
          %v591 = vor.u32 %v589, %v590
          %v592 = vshll.u32 2475754826, %v586
          %v593 = vshrl.u32 2131351028, %v587
          %v594 = vor.u32 %v592, %v593
          %v595 = vshll.u32 2131351028, %v586
          %v596 = vshrl.u32 2102212464, %v587
          %v597 = vor.u32 %v595, %v596
          %v598 = vshll.u32 2102212464, %v586
          %v599 = vshrl.u32 920167782, %v587
          %v600 = vor.u32 %v598, %v599
          %v601 = vshll.u32 920167782, %v586
          %v602 = vshrl.u32 1326507024, %v587
          %v603 = vor.u32 %v601, %v602
          %vm604 = vcmp.lt.s32.totalorder %v585, 1
          %vm605 = vcmp.lt.s32.totalorder %v585, 2
          %vm606 = vcmp.lt.s32.totalorder %v585, 3
          %vm607 = vcmp.lt.s32.totalorder %v585, 4
          %v608 = vsel %vm604, %v588, %v591
          %v609 = vsel %vm607, %v597, 2102212464
          %v610 = vsel %vm606, %v594, %v609
          %v611 = vsel %vm605, %v608, %v610
          %v612 = vsel %vm604, %v591, %v594
          %v613 = vsel %vm607, %v600, 920167782
          %v614 = vsel %vm606, %v597, %v613
          %v615 = vsel %vm605, %v612, %v614
          %v616 = vsel %vm604, %v594, %v597
          %v617 = vsel %vm607, %v603, 1326507024
          %v618 = vsel %vm606, %v600, %v617
          %v619 = vsel %vm605, %v616, %v618
          %v620 = vshll.u32 %v580, 8
          %v621 = vmul.u32.u64.compose %v620, %v619
          %v622 = vextract.low.u32 %v621
          %v623 = vextract.high.u32 %v621
          %v624 = vmul.u32.u64.compose %v620, %v615
          %v625 = vextract.low.u32 %v624
          %v626 = vextract.high.u32 %v624
          %v627 = vmul.u32 %v620, %v611
          %v628 = vadd.s32 %v623, %v625
          %vm629 = vc.u32 %v623, %v625
          %v630 = vadd.s32 %v626, 1
          %v631 = vsel %vm629, %v630, %v626
          %v632 = vadd.s32 %v627, %v631
          %v633 = vadd.s32 %v632, 536870912
          %v634 = vshrl.u32 %v633, 30
          %v635 = vshll.u32 %v634, 30
          %v636 = vsub.s32 %v632, %v635
          %vm637 = vcmp.lt.s32.totalorder %v636, 0
          %v638 = vsub.s32 0, %v636
          %v639 = vsel %vm637, %v638, %v636
          %v640 = vclz %v639
          %v641 = vsub.s32 %v640, 2
          %vm642 = vcmp.gt.s32.totalorder 0, %v641
          %v643 = vsel %vm642, 0, %v641
          %v644 = vsub.s32 32, %v643
          %v645 = vshll.u32 %v636, %v643
          %v646 = vshrl.u32 %v628, %v644
          %v647 = vor.u32 %v645, %v646
          %v648 = vsub.s32 4294967266, %v643
          %v649 = vadd.s32 %v648, 127
          %v650 = vshll.u32 %v649, 23
          %v651 = vor.u32 4788187, %v650
          %v652 = vand.u32 2147483647, %v651
          %v654 = vcvt.s32.f32 %v647
          %v655 = vmul.f32 %v654, %v652
          %v656 = vxor.u32 %v655, 2147483648
          %v657 = vsel %vm574, %v656, %v655
          %v658 = vsub.s32 4, %v634
          %v659 = vsel %vm574, %v658, %v634
          %v660 = vsel %vm573, %v362, %v657
          %v661 = vsel %vm573, 0, %v659
          %v662 = vcosq.f32.pop %v660
          %v663 = vsinq.f32.pop %v660
          %vm664 = vweird.f32 %v362
          %v665 = vadd.s32 %v661, 3
          %v666 = vand.u32 %v665, 3
          %vm667 = vcmp.lt.s32.totalorder %v666, 2
          %vm668 = vcmp.eq.s32.totalorder %v666, 0
          %v669 = vxor.u32 %v663, 2147483648
          %v670 = vsel %vm668, %v662, %v669
          %vm671 = vcmp.eq.s32.totalorder %v666, 2
          %v672 = vxor.u32 %v662, 2147483648
          %v673 = vsel %vm671, %v672, %v663
          %v674 = vsel %vm667, %v670, %v673
          %v675 = vsel %vm664, nan, %v674
          %v676 = vand.u32 2147483647, %v363
          %vm677 = vcmp.le.f32.partialorder %v676, 0.7853982
          %vm678 = vcmp.lt.s32.totalorder %v363, 0
          %v679 = vand.u32 %v363, 2139095040
          %v680 = vshrl.u32 %v679, 23
          %v681 = vsub.s32 %v680, 127
          %v682 = vand.u32 2147483647, %v363
          %v683 = vand.u32 %v682, 8388607
          %v684 = vor.u32 %v683, 8388608
          %v685 = vsub.s32 0, %v684
          %v686 = vadd.s32 %v681, 1
          %vm687 = vcmp.gt.s32.totalorder %v686, 0
          %v688 = vsel %vm687, %v686, 0
          %v689 = vshrl.u32 %v688, 5
          %v690 = vand.u32 %v688, 31
          %v691 = vsub.s32 32, %v690
          %v692 = vshrl.u32 683565275, %v691
          %v693 = vshll.u32 683565275, %v690
          %v694 = vshrl.u32 2475754826, %v691
          %v695 = vor.u32 %v693, %v694
          %v696 = vshll.u32 2475754826, %v690
          %v697 = vshrl.u32 2131351028, %v691
          %v698 = vor.u32 %v696, %v697
          %v699 = vshll.u32 2131351028, %v690
          %v700 = vshrl.u32 2102212464, %v691
          %v701 = vor.u32 %v699, %v700
          %v702 = vshll.u32 2102212464, %v690
          %v703 = vshrl.u32 920167782, %v691
          %v704 = vor.u32 %v702, %v703
          %v705 = vshll.u32 920167782, %v690
          %v706 = vshrl.u32 1326507024, %v691
          %v707 = vor.u32 %v705, %v706
          %vm708 = vcmp.lt.s32.totalorder %v689, 1
          %vm709 = vcmp.lt.s32.totalorder %v689, 2
          %vm710 = vcmp.lt.s32.totalorder %v689, 3
          %vm711 = vcmp.lt.s32.totalorder %v689, 4
          %v712 = vsel %vm708, %v692, %v695
          %v713 = vsel %vm711, %v701, 2102212464
          %v714 = vsel %vm710, %v698, %v713
          %v715 = vsel %vm709, %v712, %v714
          %v716 = vsel %vm708, %v695, %v698
          %v717 = vsel %vm711, %v704, 920167782
          %v718 = vsel %vm710, %v701, %v717
          %v719 = vsel %vm709, %v716, %v718
          %v720 = vsel %vm708, %v698, %v701
          %v721 = vsel %vm711, %v707, 1326507024
          %v722 = vsel %vm710, %v704, %v721
          %v723 = vsel %vm709, %v720, %v722
          %v724 = vshll.u32 %v684, 8
          %v725 = vmul.u32.u64.compose %v724, %v723
          %v726 = vextract.low.u32 %v725
          %v727 = vextract.high.u32 %v725
          %v728 = vmul.u32.u64.compose %v724, %v719
          %v729 = vextract.low.u32 %v728
          %v730 = vextract.high.u32 %v728
          %v731 = vmul.u32 %v724, %v715
          %v732 = vadd.s32 %v727, %v729
          %vm733 = vc.u32 %v727, %v729
          %v734 = vadd.s32 %v730, 1
          %v735 = vsel %vm733, %v734, %v730
          %v736 = vadd.s32 %v731, %v735
          %v737 = vadd.s32 %v736, 536870912
          %v738 = vshrl.u32 %v737, 30
          %v739 = vshll.u32 %v738, 30
          %v740 = vsub.s32 %v736, %v739
          %vm741 = vcmp.lt.s32.totalorder %v740, 0
          %v742 = vsub.s32 0, %v740
          %v743 = vsel %vm741, %v742, %v740
          %v744 = vclz %v743
          %v745 = vsub.s32 %v744, 2
          %vm746 = vcmp.gt.s32.totalorder 0, %v745
          %v747 = vsel %vm746, 0, %v745
          %v748 = vsub.s32 32, %v747
          %v749 = vshll.u32 %v740, %v747
          %v750 = vshrl.u32 %v732, %v748
          %v751 = vor.u32 %v749, %v750
          %v752 = vsub.s32 4294967266, %v747
          %v753 = vadd.s32 %v752, 127
          %v754 = vshll.u32 %v753, 23
          %v755 = vor.u32 4788187, %v754
          %v756 = vand.u32 2147483647, %v755
          %v758 = vcvt.s32.f32 %v751
          %v759 = vmul.f32 %v758, %v756
          %v760 = vxor.u32 %v759, 2147483648
          %v761 = vsel %vm678, %v760, %v759
          %v762 = vsub.s32 4, %v738
          %v763 = vsel %vm678, %v762, %v738
          %v764 = vsel %vm677, %v363, %v761
          %v765 = vsel %vm677, 0, %v763
          %v766 = vcosq.f32.pop %v764
          %v767 = vsinq.f32.pop %v764
          %vm768 = vweird.f32 %v363
          %v769 = vadd.s32 %v765, 3
          %v770 = vand.u32 %v769, 3
          %vm771 = vcmp.lt.s32.totalorder %v770, 2
          %vm772 = vcmp.eq.s32.totalorder %v770, 0
          %v773 = vxor.u32 %v767, 2147483648
          %v774 = vsel %vm772, %v766, %v773
          %vm775 = vcmp.eq.s32.totalorder %v770, 2
          %v776 = vxor.u32 %v766, 2147483648
          %v777 = vsel %vm775, %v776, %v767
          %v778 = vsel %vm771, %v774, %v777
          %v779 = vsel %vm768, nan, %v778
          %780 = vst [vmem:[#allocation3] sm:$0xff] %v675
          %781 = vst [vmem:[#allocation3 + $0x8] sm:$0xff] %v779
        $region48: #{tpu_custom_call.1} parent=35 // pred_fallthru
          _
        %s782 = smul.u32 %s34, 8
        %v783 = vlaneseq
        %v784 = vshrl.u32 %v783, 7
        %v785 = vstv %s782
        %v786 = vadd.s32 %v785, %v784
        %v787 = vcvt.s32.f32 %v786
        %v788 = vsub.f32 %v787, 8.0
        %v789 = vmul.f32 %v788, 0.3926991
        %v790 = vld [vmem:[%s283] sm:$0x1]
        %v791 = vlaneseq
        %v792 = vshrl.u32 %v791, 7
        %v793 = vsub.s32 0, %v792
        %v794 = vrot.slane %v790, %v793
        %v795 = vmul.f32 %v789, %v794
        %v796 = vand.u32 2147483647, %v795
        %vm797 = vcmp.le.f32.partialorder %v796, 0.7853982
        %vm798 = vcmp.lt.s32.totalorder %v795, 0
        %v799 = vand.u32 %v795, 2139095040
        %v800 = vshrl.u32 %v799, 23
        %v801 = vsub.s32 %v800, 127
        %v802 = vand.u32 2147483647, %v795
        %v803 = vand.u32 %v802, 8388607
        %v804 = vor.u32 %v803, 8388608
        %v805 = vsub.s32 0, %v804
        %v806 = vadd.s32 %v801, 1
        %vm807 = vcmp.gt.s32.totalorder %v806, 0
        %v808 = vsel %vm807, %v806, 0
        %v809 = vshrl.u32 %v808, 5
        %v810 = vand.u32 %v808, 31
        %v811 = vsub.s32 32, %v810
        %v812 = vshrl.u32 683565275, %v811
        %v813 = vshll.u32 683565275, %v810
        %v814 = vshrl.u32 2475754826, %v811
        %v815 = vor.u32 %v813, %v814
        %v816 = vshll.u32 2475754826, %v810
        %v817 = vshrl.u32 2131351028, %v811
        %v818 = vor.u32 %v816, %v817
        %v819 = vshll.u32 2131351028, %v810
        %v820 = vshrl.u32 2102212464, %v811
        %v821 = vor.u32 %v819, %v820
        %v822 = vshll.u32 2102212464, %v810
        %v823 = vshrl.u32 920167782, %v811
        %v824 = vor.u32 %v822, %v823
        %v825 = vshll.u32 920167782, %v810
        %v826 = vshrl.u32 1326507024, %v811
        %v827 = vor.u32 %v825, %v826
        %vm828 = vcmp.lt.s32.totalorder %v809, 1
        %vm829 = vcmp.lt.s32.totalorder %v809, 2
        %vm830 = vcmp.lt.s32.totalorder %v809, 3
        %vm831 = vcmp.lt.s32.totalorder %v809, 4
        %v832 = vsel %vm828, %v812, %v815
        %v833 = vsel %vm831, %v821, 2102212464
        %v834 = vsel %vm830, %v818, %v833
        %v835 = vsel %vm829, %v832, %v834
        %v836 = vsel %vm828, %v815, %v818
        %v837 = vsel %vm831, %v824, 920167782
        %v838 = vsel %vm830, %v821, %v837
        %v839 = vsel %vm829, %v836, %v838
        %v840 = vsel %vm828, %v818, %v821
        %v841 = vsel %vm831, %v827, 1326507024
        %v842 = vsel %vm830, %v824, %v841
        %v843 = vsel %vm829, %v840, %v842
        %v844 = vshll.u32 %v804, 8
        %v845 = vmul.u32.u64.compose %v844, %v843
        %v846 = vextract.low.u32 %v845
        %v847 = vextract.high.u32 %v845
        %v848 = vmul.u32.u64.compose %v844, %v839
        %v849 = vextract.low.u32 %v848
        %v850 = vextract.high.u32 %v848
        %v851 = vmul.u32 %v844, %v835
        %v852 = vadd.s32 %v847, %v849
        %vm853 = vc.u32 %v847, %v849
        %v854 = vadd.s32 %v850, 1
        %v855 = vsel %vm853, %v854, %v850
        %v856 = vadd.s32 %v851, %v855
        %v857 = vadd.s32 %v856, 536870912
        %v858 = vshrl.u32 %v857, 30
        %v859 = vshll.u32 %v858, 30
        %v860 = vsub.s32 %v856, %v859
        %vm861 = vcmp.lt.s32.totalorder %v860, 0
        %v862 = vsub.s32 0, %v860
        %v863 = vsel %vm861, %v862, %v860
        %v864 = vclz %v863
        %v865 = vsub.s32 %v864, 2
        %vm866 = vcmp.gt.s32.totalorder 0, %v865
        %v867 = vsel %vm866, 0, %v865
        %v868 = vsub.s32 32, %v867
        %v869 = vshll.u32 %v860, %v867
        %v870 = vshrl.u32 %v852, %v868
        %v871 = vor.u32 %v869, %v870
        %v872 = vsub.s32 4294967266, %v867
        %v873 = vadd.s32 %v872, 127
        %v874 = vshll.u32 %v873, 23
        %v875 = vor.u32 4788187, %v874
        %v876 = vand.u32 2147483647, %v875
        %v878 = vcvt.s32.f32 %v871
        %v879 = vmul.f32 %v878, %v876
        %v880 = vxor.u32 %v879, 2147483648
        %v881 = vsel %vm798, %v880, %v879
        %v882 = vsub.s32 4, %v858
        %v883 = vsel %vm798, %v882, %v858
        %v884 = vsel %vm797, %v795, %v881
        %v885 = vsel %vm797, 0, %v883
        %v886 = vcosq.f32.pop %v884
        %v887 = vsinq.f32.pop %v884
        %vm888 = vweird.f32 %v795
        %v889 = vand.u32 %v885, 3
        %vm890 = vcmp.lt.s32.totalorder %v889, 2
        %vm891 = vcmp.eq.s32.totalorder %v889, 0
        %v892 = vxor.u32 %v887, 2147483648
        %v893 = vsel %vm891, %v886, %v892
        %vm894 = vcmp.eq.s32.totalorder %v889, 2
        %v895 = vxor.u32 %v886, 2147483648
        %v896 = vsel %vm894, %v895, %v887
        %v897 = vsel %vm890, %v893, %v896
        %v898 = vsel %vm888, nan, %v897
        %v900 = vcombine.high %v898, %v898
        %v902 = vunpack.c.l.s4 1966171168
        %v903 = vunpack.c.0.s8 %v902
        %v904 = vlaneseq
        %v905 = vshrl.u32 %v904, 7
        %v906 = vsub.s32 %v903, %v905
        %v907 = vrot.slane %v898, %v906
        %v909 = vunpack.c.l.s4 1966171168
        %v910 = vunpack.c.0.s8 %v909
        %v911 = vlaneseq
        %v912 = vshrl.u32 %v911, 7
        %v913 = vsub.s32 %v910, %v912
        %v914 = vrot.slane %v900, %v913
        %v915 = vcombine.high %v907, %v907
        %v916 = vcombine.high %v914, %v914
        %v918 = vunpack.c.l.s4 1966171168
        %v919 = vunpack.c.0.s8 %v918
        %v920 = vlaneseq
        %v921 = vshrl.u32 %v920, 7
        %v922 = vsub.s32 %v919, %v921
        %v923 = vrot.slane %v907, %v922
        %v925 = vunpack.c.l.s4 1966171168
        %v926 = vunpack.c.0.s8 %v925
        %v927 = vlaneseq
        %v928 = vshrl.u32 %v927, 7
        %v929 = vsub.s32 %v926, %v928
        %v930 = vrot.slane %v914, %v929
        %v932 = vunpack.c.l.s4 1966171168
        %v933 = vunpack.c.0.s8 %v932
        %v934 = vlaneseq
        %v935 = vshrl.u32 %v934, 7
        %v936 = vsub.s32 %v933, %v935
        %v937 = vrot.slane %v915, %v936
        %v939 = vunpack.c.l.s4 1966171168
        %v940 = vunpack.c.0.s8 %v939
        %v941 = vlaneseq
        %v942 = vshrl.u32 %v941, 7
        %v943 = vsub.s32 %v940, %v942
        %v944 = vrot.slane %v916, %v943
        %v945 = vcombine.high %v923, %v923
        %v946 = vcombine.high %v930, %v930
        %v947 = vcombine.high %v937, %v937
        %v948 = vcombine.high %v944, %v944
        %v949 = vand.u32 2147483647, %v795
        %vm950 = vcmp.le.f32.partialorder %v949, 0.7853982
        %vm951 = vcmp.lt.s32.totalorder %v795, 0
        %v952 = vand.u32 %v795, 2139095040
        %v953 = vshrl.u32 %v952, 23
        %v954 = vsub.s32 %v953, 127
        %v955 = vand.u32 2147483647, %v795
        %v956 = vand.u32 %v955, 8388607
        %v957 = vor.u32 %v956, 8388608
        %v958 = vsub.s32 0, %v957
        %v959 = vadd.s32 %v954, 1
        %vm960 = vcmp.gt.s32.totalorder %v959, 0
        %v961 = vsel %vm960, %v959, 0
        %v962 = vshrl.u32 %v961, 5
        %v963 = vand.u32 %v961, 31
        %v964 = vsub.s32 32, %v963
        %v965 = vshrl.u32 683565275, %v964
        %v966 = vshll.u32 683565275, %v963
        %v967 = vshrl.u32 2475754826, %v964
        %v968 = vor.u32 %v966, %v967
        %v969 = vshll.u32 2475754826, %v963
        %v970 = vshrl.u32 2131351028, %v964
        %v971 = vor.u32 %v969, %v970
        %v972 = vshll.u32 2131351028, %v963
        %v973 = vshrl.u32 2102212464, %v964
        %v974 = vor.u32 %v972, %v973
        %v975 = vshll.u32 2102212464, %v963
        %v976 = vshrl.u32 920167782, %v964
        %v977 = vor.u32 %v975, %v976
        %v978 = vshll.u32 920167782, %v963
        %v979 = vshrl.u32 1326507024, %v964
        %v980 = vor.u32 %v978, %v979
        %vm981 = vcmp.lt.s32.totalorder %v962, 1
        %vm982 = vcmp.lt.s32.totalorder %v962, 2
        %vm983 = vcmp.lt.s32.totalorder %v962, 3
        %vm984 = vcmp.lt.s32.totalorder %v962, 4
        %v985 = vsel %vm981, %v965, %v968
        %v986 = vsel %vm984, %v974, 2102212464
        %v987 = vsel %vm983, %v971, %v986
        %v988 = vsel %vm982, %v985, %v987
        %v989 = vsel %vm981, %v968, %v971
        %v990 = vsel %vm984, %v977, 920167782
        %v991 = vsel %vm983, %v974, %v990
        %v992 = vsel %vm982, %v989, %v991
        %v993 = vsel %vm981, %v971, %v974
        %v994 = vsel %vm984, %v980, 1326507024
        %v995 = vsel %vm983, %v977, %v994
        %v996 = vsel %vm982, %v993, %v995
        %v997 = vshll.u32 %v957, 8
        %v998 = vmul.u32.u64.compose %v997, %v996
        %v999 = vextract.low.u32 %v998
        %v1000 = vextract.high.u32 %v998
        %v1001 = vmul.u32.u64.compose %v997, %v992
        %v1002 = vextract.low.u32 %v1001
        %v1003 = vextract.high.u32 %v1001
        %v1004 = vmul.u32 %v997, %v988
        %v1005 = vadd.s32 %v1000, %v1002
        %vm1006 = vc.u32 %v1000, %v1002
        %v1007 = vadd.s32 %v1003, 1
        %v1008 = vsel %vm1006, %v1007, %v1003
        %v1009 = vadd.s32 %v1004, %v1008
        %v1010 = vadd.s32 %v1009, 536870912
        %v1011 = vshrl.u32 %v1010, 30
        %v1012 = vshll.u32 %v1011, 30
        %v1013 = vsub.s32 %v1009, %v1012
        %vm1014 = vcmp.lt.s32.totalorder %v1013, 0
        %v1015 = vsub.s32 0, %v1013
        %v1016 = vsel %vm1014, %v1015, %v1013
        %v1017 = vclz %v1016
        %v1018 = vsub.s32 %v1017, 2
        %vm1019 = vcmp.gt.s32.totalorder 0, %v1018
        %v1020 = vsel %vm1019, 0, %v1018
        %v1021 = vsub.s32 32, %v1020
        %v1022 = vshll.u32 %v1013, %v1020
        %v1023 = vshrl.u32 %v1005, %v1021
        %v1024 = vor.u32 %v1022, %v1023
        %v1025 = vsub.s32 4294967266, %v1020
        %v1026 = vadd.s32 %v1025, 127
        %v1027 = vshll.u32 %v1026, 23
        %v1028 = vor.u32 4788187, %v1027
        %v1029 = vand.u32 2147483647, %v1028
        %v1031 = vcvt.s32.f32 %v1024
        %v1032 = vmul.f32 %v1031, %v1029
        %v1033 = vxor.u32 %v1032, 2147483648
        %v1034 = vsel %vm951, %v1033, %v1032
        %v1035 = vsub.s32 4, %v1011
        %v1036 = vsel %vm951, %v1035, %v1011
        %v1037 = vsel %vm950, %v795, %v1034
        %v1038 = vsel %vm950, 0, %v1036
        %v1039 = vcosq.f32.pop %v1037
        %v1040 = vsinq.f32.pop %v1037
        %vm1041 = vweird.f32 %v795
        %v1042 = vadd.s32 %v1038, 3
        %v1043 = vand.u32 %v1042, 3
        %vm1044 = vcmp.lt.s32.totalorder %v1043, 2
        %vm1045 = vcmp.eq.s32.totalorder %v1043, 0
        %v1046 = vxor.u32 %v1040, 2147483648
        %v1047 = vsel %vm1045, %v1039, %v1046
        %vm1048 = vcmp.eq.s32.totalorder %v1043, 2
        %v1049 = vxor.u32 %v1039, 2147483648
        %v1050 = vsel %vm1048, %v1049, %v1040
        %v1051 = vsel %vm1044, %v1047, %v1050
        %v1052 = vsel %vm1041, nan, %v1051
        %v1054 = vcombine.high %v1052, %v1052
        %v1056 = vunpack.c.l.s4 1966171168
        %v1057 = vunpack.c.0.s8 %v1056
        %v1058 = vlaneseq
        %v1059 = vshrl.u32 %v1058, 7
        %v1060 = vsub.s32 %v1057, %v1059
        %v1061 = vrot.slane %v1052, %v1060
        %v1063 = vunpack.c.l.s4 1966171168
        %v1064 = vunpack.c.0.s8 %v1063
        %v1065 = vlaneseq
        %v1066 = vshrl.u32 %v1065, 7
        %v1067 = vsub.s32 %v1064, %v1066
        %v1068 = vrot.slane %v1054, %v1067
        %v1069 = vcombine.high %v1061, %v1061
        %v1070 = vcombine.high %v1068, %v1068
        %v1072 = vunpack.c.l.s4 1966171168
        %v1073 = vunpack.c.0.s8 %v1072
        %v1074 = vlaneseq
        %v1075 = vshrl.u32 %v1074, 7
        %v1076 = vsub.s32 %v1073, %v1075
        %v1077 = vrot.slane %v1061, %v1076
        %v1079 = vunpack.c.l.s4 1966171168
        %v1080 = vunpack.c.0.s8 %v1079
        %v1081 = vlaneseq
        %v1082 = vshrl.u32 %v1081, 7
        %v1083 = vsub.s32 %v1080, %v1082
        %v1084 = vrot.slane %v1068, %v1083
        %v1086 = vunpack.c.l.s4 1966171168
        %v1087 = vunpack.c.0.s8 %v1086
        %v1088 = vlaneseq
        %v1089 = vshrl.u32 %v1088, 7
        %v1090 = vsub.s32 %v1087, %v1089
        %v1091 = vrot.slane %v1069, %v1090
        %v1093 = vunpack.c.l.s4 1966171168
        %v1094 = vunpack.c.0.s8 %v1093
        %v1095 = vlaneseq
        %v1096 = vshrl.u32 %v1095, 7
        %v1097 = vsub.s32 %v1094, %v1096
        %v1098 = vrot.slane %v1070, %v1097
        %v1099 = vcombine.high %v1077, %v1077
        %v1100 = vcombine.high %v1084, %v1084
        %v1101 = vcombine.high %v1091, %v1091
        %v1102 = vcombine.high %v1098, %v1098
        %v1103 = vld [vmem:[#allocation2] sm:$0xff]
        %v1104 = vld [vmem:[#allocation2 + $0x8] sm:$0xff]
        %v1105 = vld [vmem:[#allocation3] sm:$0xff]
        %v1106 = vld [vmem:[#allocation3 + $0x8] sm:$0xff]
        %v1107 = vlaneseq
        %v1108 = vshrl.u32 %v1107, 7
        %v1109 = vsub.s32 0, %v1108
        %v1110 = vrot.slane %v923, %v1109
        %v1111 = vlaneseq
        %v1112 = vshrl.u32 %v1111, 7
        %v1113 = vsub.s32 0, %v1112
        %v1114 = vrot.slane %v937, %v1113
        %v1115 = vlaneseq
        %v1116 = vshrl.u32 %v1115, 7
        %v1117 = vsub.s32 0, %v1116
        %v1118 = vrot.slane %v945, %v1117
        %v1119 = vlaneseq
        %v1120 = vshrl.u32 %v1119, 7
        %v1121 = vsub.s32 0, %v1120
        %v1122 = vrot.slane %v947, %v1121
        %v1123 = vlaneseq
        %v1124 = vshrl.u32 %v1123, 7
        %v1125 = vsub.s32 0, %v1124
        %v1126 = vrot.slane %v930, %v1125
        %v1127 = vlaneseq
        %v1128 = vshrl.u32 %v1127, 7
        %v1129 = vsub.s32 0, %v1128
        %v1130 = vrot.slane %v944, %v1129
        %v1131 = vlaneseq
        %v1132 = vshrl.u32 %v1131, 7
        %v1133 = vsub.s32 0, %v1132
        %v1134 = vrot.slane %v946, %v1133
        %v1135 = vlaneseq
        %v1136 = vshrl.u32 %v1135, 7
        %v1137 = vsub.s32 0, %v1136
        %v1138 = vrot.slane %v948, %v1137
        %v1147 = vmul.f32 %v1110, %v1103
        %v1148 = vmul.f32 %v1110, %v1104
        %v1149 = vmul.f32 %v1114, %v1103
        %v1150 = vmul.f32 %v1114, %v1104
        %v1151 = vmul.f32 %v1118, %v1103
        %v1152 = vmul.f32 %v1118, %v1104
        %v1153 = vmul.f32 %v1122, %v1103
        %v1154 = vmul.f32 %v1122, %v1104
        %v1155 = vmul.f32 %v1126, %v1103
        %v1156 = vmul.f32 %v1126, %v1104
        %v1157 = vmul.f32 %v1130, %v1103
        %v1158 = vmul.f32 %v1130, %v1104
        %v1159 = vmul.f32 %v1134, %v1103
        %v1160 = vmul.f32 %v1134, %v1104
        %v1161 = vmul.f32 %v1138, %v1103
        %v1162 = vmul.f32 %v1138, %v1104
        %v1163 = vlaneseq
        %v1164 = vshrl.u32 %v1163, 7
        %v1165 = vsub.s32 0, %v1164
        %v1166 = vrot.slane %v1077, %v1165
        %v1167 = vlaneseq
        %v1168 = vshrl.u32 %v1167, 7
        %v1169 = vsub.s32 0, %v1168
        %v1170 = vrot.slane %v1091, %v1169
        %v1171 = vlaneseq
        %v1172 = vshrl.u32 %v1171, 7
        %v1173 = vsub.s32 0, %v1172
        %v1174 = vrot.slane %v1099, %v1173
        %v1175 = vlaneseq
        %v1176 = vshrl.u32 %v1175, 7
        %v1177 = vsub.s32 0, %v1176
        %v1178 = vrot.slane %v1101, %v1177
        %v1179 = vlaneseq
        %v1180 = vshrl.u32 %v1179, 7
        %v1181 = vsub.s32 0, %v1180
        %v1182 = vrot.slane %v1084, %v1181
        %v1183 = vlaneseq
        %v1184 = vshrl.u32 %v1183, 7
        %v1185 = vsub.s32 0, %v1184
        %v1186 = vrot.slane %v1098, %v1185
        %v1187 = vlaneseq
        %v1188 = vshrl.u32 %v1187, 7
        %v1189 = vsub.s32 0, %v1188
        %v1190 = vrot.slane %v1100, %v1189
        %v1191 = vlaneseq
        %v1192 = vshrl.u32 %v1191, 7
        %v1193 = vsub.s32 0, %v1192
        %v1194 = vrot.slane %v1102, %v1193
        %v1203 = vmul.f32 %v1166, %v1105
        %v1204 = vmul.f32 %v1166, %v1106
        %v1205 = vmul.f32 %v1170, %v1105
        %v1206 = vmul.f32 %v1170, %v1106
        %v1207 = vmul.f32 %v1174, %v1105
        %v1208 = vmul.f32 %v1174, %v1106
        %v1209 = vmul.f32 %v1178, %v1105
        %v1210 = vmul.f32 %v1178, %v1106
        %v1211 = vmul.f32 %v1182, %v1105
        %v1212 = vmul.f32 %v1182, %v1106
        %v1213 = vmul.f32 %v1186, %v1105
        %v1214 = vmul.f32 %v1186, %v1106
        %v1215 = vmul.f32 %v1190, %v1105
        %v1216 = vmul.f32 %v1190, %v1106
        %v1217 = vmul.f32 %v1194, %v1105
        %v1218 = vmul.f32 %v1194, %v1106
        %v1219 = vsub.f32 %v1147, %v1203
        %v1220 = vsub.f32 %v1148, %v1204
        %v1221 = vsub.f32 %v1149, %v1205
        %v1222 = vsub.f32 %v1150, %v1206
        %v1223 = vsub.f32 %v1151, %v1207
        %v1224 = vsub.f32 %v1152, %v1208
        %v1225 = vsub.f32 %v1153, %v1209
        %v1226 = vsub.f32 %v1154, %v1210
        %v1227 = vsub.f32 %v1155, %v1211
        %v1228 = vsub.f32 %v1156, %v1212
        %v1229 = vsub.f32 %v1157, %v1213
        %v1230 = vsub.f32 %v1158, %v1214
        %v1231 = vsub.f32 %v1159, %v1215
        %v1232 = vsub.f32 %v1160, %v1216
        %v1233 = vsub.f32 %v1161, %v1217
        %v1234 = vsub.f32 %v1162, %v1218
        %v1235 = vmul.f32 %v1166, %v1103
        %v1236 = vmul.f32 %v1166, %v1104
        %v1237 = vmul.f32 %v1170, %v1103
        %v1238 = vmul.f32 %v1170, %v1104
        %v1239 = vmul.f32 %v1174, %v1103
        %v1240 = vmul.f32 %v1174, %v1104
        %v1241 = vmul.f32 %v1178, %v1103
        %v1242 = vmul.f32 %v1178, %v1104
        %v1243 = vmul.f32 %v1182, %v1103
        %v1244 = vmul.f32 %v1182, %v1104
        %v1245 = vmul.f32 %v1186, %v1103
        %v1246 = vmul.f32 %v1186, %v1104
        %v1247 = vmul.f32 %v1190, %v1103
        %v1248 = vmul.f32 %v1190, %v1104
        %v1249 = vmul.f32 %v1194, %v1103
        %v1250 = vmul.f32 %v1194, %v1104
        %v1251 = vmul.f32 %v1110, %v1105
        %v1252 = vmul.f32 %v1110, %v1106
        %v1253 = vmul.f32 %v1114, %v1105
        %v1254 = vmul.f32 %v1114, %v1106
        %v1255 = vmul.f32 %v1118, %v1105
        %v1256 = vmul.f32 %v1118, %v1106
        %v1257 = vmul.f32 %v1122, %v1105
        %v1258 = vmul.f32 %v1122, %v1106
        %v1259 = vmul.f32 %v1126, %v1105
        %v1260 = vmul.f32 %v1126, %v1106
        %v1261 = vmul.f32 %v1130, %v1105
        %v1262 = vmul.f32 %v1130, %v1106
        %v1263 = vmul.f32 %v1134, %v1105
        %v1264 = vmul.f32 %v1134, %v1106
        %v1265 = vmul.f32 %v1138, %v1105
        %v1266 = vmul.f32 %v1138, %v1106
        %v1267 = vadd.f32 %v1235, %v1251
        %v1268 = vadd.f32 %v1236, %v1252
        %v1269 = vadd.f32 %v1237, %v1253
        %v1270 = vadd.f32 %v1238, %v1254
        %v1271 = vadd.f32 %v1239, %v1255
        %v1272 = vadd.f32 %v1240, %v1256
        %v1273 = vadd.f32 %v1241, %v1257
        %v1274 = vadd.f32 %v1242, %v1258
        %v1275 = vadd.f32 %v1243, %v1259
        %v1276 = vadd.f32 %v1244, %v1260
        %v1277 = vadd.f32 %v1245, %v1261
        %v1278 = vadd.f32 %v1246, %v1262
        %v1279 = vadd.f32 %v1247, %v1263
        %v1280 = vadd.f32 %v1248, %v1264
        %v1281 = vadd.f32 %v1249, %v1265
        %v1282 = vadd.f32 %v1250, %v1266
        %v1283 = vld [vmem:[%s274] sm:$0xff]
        %v1284 = vld [vmem:[%s274 + $0x8] sm:$0xff]
        %v1285 = vld [vmem:[%s274 + $0x10] sm:$0xff]
        %v1286 = vld [vmem:[%s274 + $0x18] sm:$0xff]
        %v1287 = vld [vmem:[#allocation4] sm:$0xff]
        %v1288 = vld [vmem:[#allocation4 + $0x8] sm:$0xff]
        %v1289 = vld [vmem:[#allocation4 + $0x10] sm:$0xff]
        %v1290 = vld [vmem:[#allocation4 + $0x18] sm:$0xff]
        %1291 = vmatprep.subr.mxu0 0.0
        %1292 = vmatpush1.msra.mxu0 %v1219
        %1293 = vmatprep.subr.mxu0 0.0
        %1294 = vmatpush1.msra.mxu0 %v1220
        %1295 = vmatprep.subr.mxu0 0.0
        %1296 = vmatpush1.msra.mxu0 %v1221
        %1297 = vmatprep.subr.mxu0 0.0
        %1298 = vmatpush1.msra.mxu0 %v1222
        %1299 = vmatprep.subr.mxu0 0.0
        %1300 = vmatpush1.msra.mxu0 %v1223
        %1301 = vmatprep.subr.mxu0 0.0
        %1302 = vmatpush1.msra.mxu0 %v1224
        %1303 = vmatprep.subr.mxu0 0.0
        %1304 = vmatpush1.msra.mxu0 %v1225
        %1305 = vmatprep.subr.mxu0 0.0
        %1306 = vmatpush1.msra.mxu0 %v1226
        %1307 = vmatprep.subr.mxu0 0.0
        %1308 = vmatpush1.msra.mxu0 %v1227
        %1309 = vmatprep.subr.mxu0 0.0
        %1310 = vmatpush1.msra.mxu0 %v1228
        %1311 = vmatprep.subr.mxu0 0.0
        %1312 = vmatpush1.msra.mxu0 %v1229
        %1313 = vmatprep.subr.mxu0 0.0
        %1314 = vmatpush1.msra.mxu0 %v1230
        %1315 = vmatprep.subr.mxu0 0.0
        %1316 = vmatpush1.msra.mxu0 %v1231
        %1317 = vmatprep.subr.mxu0 0.0
        %1318 = vmatpush1.msra.mxu0 %v1232
        %1319 = vmatprep.subr.mxu0 0.0
        %1320 = vmatpush1.msra.mxu0 %v1233
        %1321 = vmatprep.subr.mxu0 0.0
        %1322 = vmatpush1.msra.mxu0 %v1234
        %1323 = vmatprep.subr.mxu0 0.0
        %1324 = vmatpush1.msra.mxu0 0.0
        %1325 = vmatprep.subr.mxu0 0.0
        %1326 = vmatpush1.msra.mxu0 0.0
        %1327 = vmatprep.subr.mxu0 0.0
        %1328 = vmatpush1.msra.mxu0 0.0
        %1329 = vmatprep.subr.mxu0 0.0
        %1330 = vmatpush1.msra.mxu0 0.0
        %1331 = vmatprep.subr.mxu0 0.0
        %1332 = vmatpush1.msra.mxu0 0.0
        %1333 = vmatprep.subr.mxu0 0.0
        %1334 = vmatpush1.msra.mxu0 0.0
        %1335 = vmatprep.subr.mxu0 0.0
        %1336 = vmatpush1.msra.mxu0 0.0
        %1337 = vmatprep.subr.mxu0 0.0
        %1338 = vmatpush1.msra.mxu0 0.0
        %1339 = vmatprep.subr.mxu0 0.0
        %1340 = vmatpush1.msra.mxu0 0.0
        %1341 = vmatprep.subr.mxu0 0.0
        %1342 = vmatpush1.msra.mxu0 0.0
        %1343 = vmatprep.subr.mxu0 0.0
        %1344 = vmatpush1.msra.mxu0 0.0
        %1345 = vmatprep.subr.mxu0 0.0
        %1346 = vmatpush1.msra.mxu0 0.0
        %1347 = vmatprep.subr.mxu0 0.0
        %1348 = vmatpush1.msra.mxu0 0.0
        %1349 = vmatprep.subr.mxu0 0.0
        %1350 = vmatpush1.msra.mxu0 0.0
        %1351 = vmatprep.subr.mxu0 0.0
        %1352 = vmatpush1.msra.mxu0 0.0
        %1353 = vmatprep.subr.mxu0 0.0
        %1354 = vmatpush1.msra.mxu0 0.0
        %1355 = vmatprep.mubr.f32.mxu0 0.0
        %1356 = vmatmul.mubr.f32.gmra.mrb[0].mxu0 %v1283
        %v1357 = vpop.f32.mrb[0].mxu0
        %v1358 = vadd.f32 0.0, %v1357
        %v1359 = vpop.f32.mrb[0].mxu0
        %1360 = vmatprep.mubr.f32.mxu0 0.0
        %1361 = vmatmul.mubr.f32.gmra.mrb[0].mxu0 %v1284
        %v1362 = vpop.f32.mrb[0].mxu0
        %v1363 = vadd.f32 0.0, %v1362
        %v1364 = vpop.f32.mrb[0].mxu0
        %1365 = vmatprep.mubr.f32.mxu0 0.0
        %1366 = vmatmul.mubr.f32.gmra.mrb[0].mxu0 %v1285
        %v1367 = vpop.f32.mrb[0].mxu0
        %v1368 = vadd.f32 0.0, %v1367
        %v1369 = vpop.f32.mrb[0].mxu0
        %1370 = vmatprep.mubr.f32.mxu0 0.0
        %1371 = vmatmul.mubr.f32.gmra.mrb[0].mxu0 %v1286
        %v1372 = vpop.f32.mrb[0].mxu0
        %v1373 = vadd.f32 0.0, %v1372
        %v1374 = vpop.f32.mrb[0].mxu0
        %1375 = vdwg.mxu0
        %v1376 = vadd.f32 %v1287, %v1358
        %v1377 = vadd.f32 %v1288, %v1363
        %v1378 = vadd.f32 %v1289, %v1368
        %v1379 = vadd.f32 %v1290, %v1373
        %1380 = vst [vmem:[#allocation4] sm:$0xff] %v1376
        %1381 = vst [vmem:[#allocation4 + $0x8] sm:$0xff] %v1377
        %1382 = vst [vmem:[#allocation4 + $0x10] sm:$0xff] %v1378
        %1383 = vst [vmem:[#allocation4 + $0x18] sm:$0xff] %v1379
        %v1384 = vld [vmem:[#allocation5] sm:$0xff]
        %v1385 = vld [vmem:[#allocation5 + $0x8] sm:$0xff]
        %v1386 = vld [vmem:[#allocation5 + $0x10] sm:$0xff]
        %v1387 = vld [vmem:[#allocation5 + $0x18] sm:$0xff]
        %1388 = vmatprep.subr.mxu0 0.0
        %1389 = vmatpush1.msra.mxu0 %v1267
        %1390 = vmatprep.subr.mxu0 0.0
        %1391 = vmatpush1.msra.mxu0 %v1268
        %1392 = vmatprep.subr.mxu0 0.0
        %1393 = vmatpush1.msra.mxu0 %v1269
        %1394 = vmatprep.subr.mxu0 0.0
        %1395 = vmatpush1.msra.mxu0 %v1270
        %1396 = vmatprep.subr.mxu0 0.0
        %1397 = vmatpush1.msra.mxu0 %v1271
        %1398 = vmatprep.subr.mxu0 0.0
        %1399 = vmatpush1.msra.mxu0 %v1272
        %1400 = vmatprep.subr.mxu0 0.0
        %1401 = vmatpush1.msra.mxu0 %v1273
        %1402 = vmatprep.subr.mxu0 0.0
        %1403 = vmatpush1.msra.mxu0 %v1274
        %1404 = vmatprep.subr.mxu0 0.0
        %1405 = vmatpush1.msra.mxu0 %v1275
        %1406 = vmatprep.subr.mxu0 0.0
        %1407 = vmatpush1.msra.mxu0 %v1276
        %1408 = vmatprep.subr.mxu0 0.0
        %1409 = vmatpush1.msra.mxu0 %v1277
        %1410 = vmatprep.subr.mxu0 0.0
        %1411 = vmatpush1.msra.mxu0 %v1278
        %1412 = vmatprep.subr.mxu0 0.0
        %1413 = vmatpush1.msra.mxu0 %v1279
        %1414 = vmatprep.subr.mxu0 0.0
        %1415 = vmatpush1.msra.mxu0 %v1280
        %1416 = vmatprep.subr.mxu0 0.0
        %1417 = vmatpush1.msra.mxu0 %v1281
        %1418 = vmatprep.subr.mxu0 0.0
        %1419 = vmatpush1.msra.mxu0 %v1282
        %1420 = vmatprep.subr.mxu0 0.0
        %1421 = vmatpush1.msra.mxu0 0.0
        %1422 = vmatprep.subr.mxu0 0.0
        %1423 = vmatpush1.msra.mxu0 0.0
        %1424 = vmatprep.subr.mxu0 0.0
        %1425 = vmatpush1.msra.mxu0 0.0
        %1426 = vmatprep.subr.mxu0 0.0
        %1427 = vmatpush1.msra.mxu0 0.0
        %1428 = vmatprep.subr.mxu0 0.0
        %1429 = vmatpush1.msra.mxu0 0.0
        %1430 = vmatprep.subr.mxu0 0.0
        %1431 = vmatpush1.msra.mxu0 0.0
        %1432 = vmatprep.subr.mxu0 0.0
        %1433 = vmatpush1.msra.mxu0 0.0
        %1434 = vmatprep.subr.mxu0 0.0
        %1435 = vmatpush1.msra.mxu0 0.0
        %1436 = vmatprep.subr.mxu0 0.0
        %1437 = vmatpush1.msra.mxu0 0.0
        %1438 = vmatprep.subr.mxu0 0.0
        %1439 = vmatpush1.msra.mxu0 0.0
        %1440 = vmatprep.subr.mxu0 0.0
        %1441 = vmatpush1.msra.mxu0 0.0
        %1442 = vmatprep.subr.mxu0 0.0
        %1443 = vmatpush1.msra.mxu0 0.0
        %1444 = vmatprep.subr.mxu0 0.0
        %1445 = vmatpush1.msra.mxu0 0.0
        %1446 = vmatprep.subr.mxu0 0.0
        %1447 = vmatpush1.msra.mxu0 0.0
        %1448 = vmatprep.subr.mxu0 0.0
        %1449 = vmatpush1.msra.mxu0 0.0
        %1450 = vmatprep.subr.mxu0 0.0
        %1451 = vmatpush1.msra.mxu0 0.0
        %1452 = vmatprep.mubr.f32.mxu0 0.0
        %1453 = vmatmul.mubr.f32.gmra.mrb[0].mxu0 %v1283
        %v1454 = vpop.f32.mrb[0].mxu0
        %v1455 = vadd.f32 0.0, %v1454
        %v1456 = vpop.f32.mrb[0].mxu0
        %1457 = vmatprep.mubr.f32.mxu0 0.0
        %1458 = vmatmul.mubr.f32.gmra.mrb[0].mxu0 %v1284
        %v1459 = vpop.f32.mrb[0].mxu0
        %v1460 = vadd.f32 0.0, %v1459
        %v1461 = vpop.f32.mrb[0].mxu0
        %1462 = vmatprep.mubr.f32.mxu0 0.0
        %1463 = vmatmul.mubr.f32.gmra.mrb[0].mxu0 %v1285
        %v1464 = vpop.f32.mrb[0].mxu0
        %v1465 = vadd.f32 0.0, %v1464
        %v1466 = vpop.f32.mrb[0].mxu0
        %1467 = vmatprep.mubr.f32.mxu0 0.0
        %1468 = vmatmul.mubr.f32.gmra.mrb[0].mxu0 %v1286
        %v1469 = vpop.f32.mrb[0].mxu0
        %v1470 = vadd.f32 0.0, %v1469
        %v1471 = vpop.f32.mrb[0].mxu0
        %1472 = vdwg.mxu0
        %v1473 = vadd.f32 %v1384, %v1455
        %v1474 = vadd.f32 %v1385, %v1460
        %v1475 = vadd.f32 %v1386, %v1465
        %v1476 = vadd.f32 %v1387, %v1470
        %1477 = vst [vmem:[#allocation5] sm:$0xff] %v1473
        %1478 = vst [vmem:[#allocation5 + $0x8] sm:$0xff] %v1474
        %1479 = vst [vmem:[#allocation5 + $0x10] sm:$0xff] %v1475
        %1480 = vst [vmem:[#allocation5 + $0x18] sm:$0xff] %v1476
        %p1481 = scmp.eq.s32.totalorder %s34, 1
        // Predicated region
        $region49: #{tpu_custom_call.1} parent=35 // pred_check
          %p1482 = pneg %p1481
        $region50: #{tpu_custom_call.1} parent=35 // pred_check_branch
          %1484 = sbr.rel (%p1482) target = $region52
        $region51: #{tpu_custom_call.1} parent=35 // pred_region
          %v1485 = vld [vmem:[#allocation4] sm:$0xff]
          %v1486 = vld [vmem:[#allocation4 + $0x8] sm:$0xff]
          %v1487 = vld [vmem:[#allocation4 + $0x10] sm:$0xff]
          %v1488 = vld [vmem:[#allocation4 + $0x18] sm:$0xff]
          %v1489 = vld [vmem:[#allocation5] sm:$0xff]
          %v1490 = vld [vmem:[#allocation5 + $0x8] sm:$0xff]
          %v1491 = vld [vmem:[#allocation5 + $0x10] sm:$0xff]
          %v1492 = vld [vmem:[#allocation5 + $0x18] sm:$0xff]
          %v1493 = vadd.f32 %v1485, %v1491
          %v1494 = vadd.f32 %v1486, %v1492
          %v1495 = vsub.f32 %v1487, %v1489
          %v1496 = vsub.f32 %v1488, %v1490
          %v1497 = vld [vmem:[%s331] sm:$0x3]
          %v1500 = vunpack.c.l.s4 1966171168
          %v1501 = vunpack.c.0.s8 %v1500
          %v1502 = vlaneseq
          %v1503 = vshrl.u32 %v1502, 7
          %v1504 = vsub.s32 %v1501, %v1503
          %v1505 = vrot.slane %v1497, %v1504
          %v1506 = vcombine.high %v1505, %v1505
          %v1508 = vunpack.c.l.s4 1966171168
          %v1509 = vunpack.c.0.s8 %v1508
          %v1510 = vlaneseq
          %v1511 = vshrl.u32 %v1510, 7
          %v1512 = vsub.s32 %v1509, %v1511
          %v1513 = vrot.slane %v1505, %v1512
          %v1515 = vunpack.c.l.s4 1966171168
          %v1516 = vunpack.c.0.s8 %v1515
          %v1517 = vlaneseq
          %v1518 = vshrl.u32 %v1517, 7
          %v1519 = vsub.s32 %v1516, %v1518
          %v1520 = vrot.slane %v1506, %v1519
          %v1521 = vld [vmem:[%s335] sm:$0x3]
          %v1524 = vunpack.c.l.s4 1966171168
          %v1525 = vunpack.c.0.s8 %v1524
          %v1526 = vlaneseq
          %v1527 = vshrl.u32 %v1526, 7
          %v1528 = vsub.s32 %v1525, %v1527
          %v1529 = vrot.slane %v1521, %v1528
          %v1530 = vcombine.high %v1529, %v1529
          %v1532 = vunpack.c.l.s4 1966171168
          %v1533 = vunpack.c.0.s8 %v1532
          %v1534 = vlaneseq
          %v1535 = vshrl.u32 %v1534, 7
          %v1536 = vsub.s32 %v1533, %v1535
          %v1537 = vrot.slane %v1529, %v1536
          %v1539 = vunpack.c.l.s4 1966171168
          %v1540 = vunpack.c.0.s8 %v1539
          %v1541 = vlaneseq
          %v1542 = vshrl.u32 %v1541, 7
          %v1543 = vsub.s32 %v1540, %v1542
          %v1544 = vrot.slane %v1530, %v1543
          %v1545 = vlaneseq
          %v1546 = vshrl.u32 %v1545, 7
          %v1547 = vsub.s32 0, %v1546
          %v1548 = vrot.slane %v1513, %v1547
          %v1549 = vlaneseq
          %v1550 = vshrl.u32 %v1549, 7
          %v1551 = vsub.s32 0, %v1550
          %v1552 = vrot.slane %v1520, %v1551
          %v1555 = vmul.f32 %v1493, %v1548
          %v1556 = vmul.f32 %v1494, %v1552
          %v1557 = vlaneseq
          %v1558 = vshrl.u32 %v1557, 7
          %v1559 = vsub.s32 0, %v1558
          %v1560 = vrot.slane %v1537, %v1559
          %v1561 = vlaneseq
          %v1562 = vshrl.u32 %v1561, 7
          %v1563 = vsub.s32 0, %v1562
          %v1564 = vrot.slane %v1544, %v1563
          %v1567 = vmul.f32 %v1495, %v1560
          %v1568 = vmul.f32 %v1496, %v1564
          %v1569 = vsub.f32 %v1555, %v1567
          %v1570 = vsub.f32 %v1556, %v1568
          %v1571 = vadd.f32 %v1569, %v1570
          %1572 = vst [vmem:[%s320] sm:$0xff] %v1571
          %v1573 = vmul.f32 %v1493, %v1560
          %v1574 = vmul.f32 %v1494, %v1564
          %v1575 = vmul.f32 %v1495, %v1548
          %v1576 = vmul.f32 %v1496, %v1552
          %v1577 = vadd.f32 %v1573, %v1575
          %v1578 = vadd.f32 %v1574, %v1576
          %v1579 = vadd.f32 %v1577, %v1578
          %1580 = vst [vmem:[%s327] sm:$0xff] %v1579
        $region52: #{tpu_custom_call.1} parent=35 // pred_fallthru
          _
        %s1581 = sand.u32 %s153, 1
        %s1582 = scalar_lea.sflag [#allocation8], %s1581
        %s1583 = sand.u32 %s153, 1
        %s1584 = smul.addr %s1583, 8
        %s1585 = scalar_lea.vmem [#allocation11], %s1584
        %s1586 = sand.u32 %s179, 1
        %s1587 = scalar_lea.sflag [#allocation13], %s1586
        %s1588 = sand.u32 %s179, 1
        %s1589 = smul.addr %s1588, 8
        %s1590 = scalar_lea.vmem [#allocation12], %s1589
        // Predicated region
        $region53: #{tpu_custom_call.1} parent=35 // pred_check
          %p1591 = pneg %p163
        $region54: #{tpu_custom_call.1} parent=35 // pred_check_branch
          %1593 = sbr.rel (%p1591) target = $region56
        $region55: #{tpu_custom_call.1} parent=35 // pred_region
          %s1595 = ssub.s32 128, 128
          %1596 = vsyncadd %s1582, %s1595
          %s1597 = smul.addr %s33, 128
          %s1598 = scalar_lea.hbm %s4, %s1597
          %s1600 = sshll.u32 %s1585, 4
          %s1601 = int_to_ptr.vmem [resolvable:$true] %s1600
          %1603 = dma.vmem_to_hbm [thread:$0]  %s1601, 128, %s1598, %s1582
        $region56: #{tpu_custom_call.1} parent=35 // pred_fallthru
          _
        // Predicated region
        $region57: #{tpu_custom_call.1} parent=35 // pred_check
          %p1604 = pneg %p189
        $region58: #{tpu_custom_call.1} parent=35 // pred_check_branch
          %1606 = sbr.rel (%p1604) target = $region60
        $region59: #{tpu_custom_call.1} parent=35 // pred_region
          %s1608 = ssub.s32 128, 128
          %1609 = vsyncadd %s1587, %s1608
          %s1610 = smul.addr %s33, 128
          %s1611 = scalar_lea.hbm %s5, %s1610
          %s1613 = sshll.u32 %s1590, 4
          %s1614 = int_to_ptr.vmem [resolvable:$true] %s1613
          %1616 = dma.vmem_to_hbm [thread:$0]  %s1614, 128, %s1611, %s1587
        $region60: #{tpu_custom_call.1} parent=35 // pred_fallthru
          _
      $region36: #{tpu_custom_call.1} parent=5 // pred_fallthru
        _
      %p1617 = scmp.le.s32.totalorder 2, %s24
      // Predicated region
      $region61: #{tpu_custom_call.1} parent=5 // pred_check
        %p1618 = pneg %p1617
      $region62: #{tpu_custom_call.1} parent=5 // pred_check_branch
        %1620 = sbr.rel (%p1618) target = $region64
      $region63: #{tpu_custom_call.1} parent=5 // pred_region
        %s1621 = ssub.s32 %s24, 2
        // Predicated region
        $region65: #{tpu_custom_call.1} parent=63 // pred_check
          %p1622 = pneg %p169
        $region66: #{tpu_custom_call.1} parent=63 // pred_check_branch
          %1624 = sbr.rel (%p1622) target = $region68
        $region67: #{tpu_custom_call.1} parent=63 // pred_region
          %s1625 = sand.u32 %s154, 1
          %s1626 = scalar_lea.sflag [#allocation8], %s1625
          %s1627 = sand.u32 %s154, 1
          %s1628 = smul.addr %s1627, 8
          %s1629 = scalar_lea.vmem [#allocation11], %s1628
          %1630 = dma.done %s1626, 128
        $region68: #{tpu_custom_call.1} parent=63 // pred_fallthru
          _
        // Predicated region
        $region69: #{tpu_custom_call.1} parent=63 // pred_check
          %p1631 = pneg %p195
        $region70: #{tpu_custom_call.1} parent=63 // pred_check_branch
          %1633 = sbr.rel (%p1631) target = $region72
        $region71: #{tpu_custom_call.1} parent=63 // pred_region
          %s1634 = sand.u32 %s180, 1
          %s1635 = scalar_lea.sflag [#allocation13], %s1634
          %s1636 = sand.u32 %s180, 1
          %s1637 = smul.addr %s1636, 8
          %s1638 = scalar_lea.vmem [#allocation12], %s1637
          %1639 = dma.done %s1635, 128
        $region72: #{tpu_custom_call.1} parent=63 // pred_fallthru
          _
      $region64: #{tpu_custom_call.1} parent=5 // pred_fallthru
        _
    $region6: #{tpu_custom_call.1} parent=1 // loop_footer
      %s28 = sadd.s32 1, %s24
    $region7: #{tpu_custom_call.1} parent=1 // loop_footer_branch
      %23 = sbr.rel target = $region3
    $region8: #{tpu_custom_call.1} parent=1 // loop_exit
      _
    %1640 = vsyncpa [#allocation7], 1
    %s1641 = scalar_lea.sflag [#allocation7], 1
    %1642 = vsyncpa %s1641, 1
    %1643 = vsyncpa [#allocation10], 1
    %s1644 = scalar_lea.sflag [#allocation10], 1
    %1645 = vsyncpa %s1644, 1
    %1646 = vsyncpa [#allocation8], 1
    %s1647 = scalar_lea.sflag [#allocation8], 1
    %1648 = vsyncpa %s1647, 1
    %1649 = vsyncpa [#allocation13], 1
    %s1650 = scalar_lea.sflag [#allocation13], 1
    %1651 = vsyncpa %s1650, 1

</llo_original>
